<compile_context>
chip_gen: v5e
topology: v5e:2x2
jax: 0.10.0
libtpu: 0.0.40
codegen_flags: <defaults>
</compile_context>

<pallas_src>
import jax
import jax.numpy as jnp
from jax.experimental import pallas as pl
from jax.experimental.pallas import tpu as pltpu

FLOAT_MIN = -3.4e38  # same constant ray.rllib uses for action masking

IN_F = 9          # board features
K1P = 16          # padded contracting dim for layer 1 (9 -> 16, padded in VMEM)
HID = 256         # hidden width
OUT_F = 10        # number of actions
OUT_P = 128       # lane-padded action dim (head weights only)
TILE_M_MAX = 512  # max batch rows per grid step


def _policy_kernel(x_ref, y_ref, w1_ref, b1_ref, w2_ref, b2_ref, w3_ref, b3_ref,
                   idx_ref, x16_ref, ymask_ref):
    # ---- widen x 9 -> 16 feature lanes in VMEM (zero-padded, bf16) ----
    # Keeps the layer-1 matmul at the aligned (TILE_M,16)x(16,256) shape while
    # streaming only 9 f32 lanes per row from HBM.
    x16_ref[...] = jnp.zeros_like(x16_ref)
    x16_ref[:, :IN_F] = x_ref[...].astype(jnp.bfloat16)

    # ---- widen action mask 10 -> 128 lanes in VMEM (padded lanes = 0 = illegal) ----
    ymask_ref[...] = jnp.zeros_like(ymask_ref)
    ymask_ref[:, :OUT_F] = y_ref[...]

    # ---- actor_encoder: Linear(9,256) + ReLU + Linear(256,256) + ReLU ----
    h1 = jnp.dot(x16_ref[...], w1_ref[...],
                 preferred_element_type=jnp.float32) + b1_ref[...]
    h1 = jnp.maximum(h1, 0.0).astype(jnp.bfloat16)                   # (TILE_M, 256)
    h2 = jnp.dot(h1, w2_ref[...], preferred_element_type=jnp.float32) + b2_ref[...]
    h2 = jnp.maximum(h2, 0.0).astype(jnp.bfloat16)                   # (TILE_M, 256)

    # ---- pi head: Linear(256, 10) (lane-padded to 128) ----
    logit = jnp.dot(h2, w3_ref[...], preferred_element_type=jnp.float32) + b3_ref[...]
    # (TILE_M, 128) f32, first 10 lanes valid

    # ---- action masking: logit[y == 0] = FLOAT_MIN (padded lanes have y==0) ----
    logit = jnp.where(ymask_ref[...] == 0.0, FLOAT_MIN, logit)

    # ---- argmax (softmax dropped: argmax(softmax(z)) == argmax(z)) ----
    # First index of the max, matching jnp argmax tie-breaking.
    mx = jnp.max(logit, axis=-1, keepdims=True)
    ids = jax.lax.broadcasted_iota(jnp.int32, logit.shape, 1)
    idx = jnp.min(jnp.where(logit == mx, ids, jnp.int32(2 ** 30)), axis=-1)  # (TILE_M,)
    idx_ref[...] = idx.reshape((1, -1)).astype(jnp.int32)
    # TODO(synk): sample=True path (torch.multinomial) not implemented; only the
    # default argmax branch is reproduced.


def prepare_params(params):
    """One-time weight prep: pad to lane/sublane-friendly shapes, cast to bf16."""
    w1, b1, w2, b2, w3, b3 = params
    w1p = jnp.zeros((K1P, HID), jnp.bfloat16).at[:IN_F, :].set(w1.astype(jnp.bfloat16))
    b1p = b1.reshape(1, HID).astype(jnp.float32)
    w2p = w2.astype(jnp.bfloat16)
    b2p = b2.reshape(1, HID).astype(jnp.float32)
    w3p = jnp.zeros((HID, OUT_P), jnp.bfloat16).at[:, :OUT_F].set(w3.astype(jnp.bfloat16))
    b3p = jnp.zeros((1, OUT_P), jnp.float32).at[0, :OUT_F].set(b3.astype(jnp.float32))
    return w1p, b1p, w2p, b2p, w3p, b3p


def _round_up(n, m):
    return ((n + m - 1) // m) * m


def _choose_tiling(batch):
    """Return (tile_m, padded_batch).

    * Tiles up to 512 rows to amortize per-grid-step overhead.
    * Keeps >=2 grid steps whenever batch > 128 so v7x's two TensorCores both
      get work (no-op on v5e/v6e).
    * Tiny batches use a single full-size block (block == array dims is legal).
    """
    n128 = _round_up(batch, 128) // 128
    if n128 <= 1:
        tm = max(8, _round_up(batch, 8))
        return tm, tm
    groups = min(TILE_M_MAX // 128, max(1, n128 // 2))
    tm = 128 * groups
    return tm, _round_up(batch, tm)


@jax.jit
def model_export_forward(x, y, padded_params):
    """x: (B, 9) or (9,), y: (B, 10) or (10,) -> (B,) int32 (or scalar) action index."""
    w1p, b1p, w2p, b2p, w3p, b3p = padded_params

    single = x.ndim == 1
    if single:
        x = x[None, :]
        y = y[None, :]

    B = x.shape[0]
    tm, B_pad = _choose_tiling(B)

    # No lane padding / dtype conversion passes in the wrapper; only pad the
    # batch axis when it is not a multiple of the tile (zero rows are masked
    # rows -> argmax 0, and they are sliced off below).
    x = x.astype(jnp.float32)
    y = y.astype(jnp.float32)
    if B_pad != B:
        x = jnp.pad(x, ((0, B_pad - B), (0, 0)))
        y = jnp.pad(y, ((0, B_pad - B), (0, 0)))

    grid = (B_pad // tm,)
    flops = 2 * B_pad * (K1P * HID + HID * HID + HID * OUT_P)
    bytes_accessed = (B_pad * (IN_F + OUT_F + 1) * 4
                      + (K1P * HID + HID * HID + HID * OUT_P) * 2
                      + (2 * HID + OUT_P) * 4)

    out = pl.pallas_call(
        _policy_kernel,
        out_shape=jax.ShapeDtypeStruct((1, B_pad), jnp.int32),
        grid_spec=pltpu.PrefetchScalarGridSpec(
            num_scalar_prefetch=0,
            grid=grid,
            in_specs=[
                pl.BlockSpec((tm, IN_F), lambda i: (i, 0)),    # x tile (B,9) f32
                pl.BlockSpec((tm, OUT_F), lambda i: (i, 0)),   # y tile (B,10) f32
                pl.BlockSpec((K1P, HID), lambda i: (0, 0)),    # w1 (resident)
                pl.BlockSpec((1, HID), lambda i: (0, 0)),      # b1 (resident)
                pl.BlockSpec((HID, HID), lambda i: (0, 0)),    # w2 (resident)
                pl.BlockSpec((1, HID), lambda i: (0, 0)),      # b2 (resident)
                pl.BlockSpec((HID, OUT_P), lambda i: (0, 0)),  # w3 (resident)
                pl.BlockSpec((1, OUT_P), lambda i: (0, 0)),    # b3 (resident)
            ],
            out_specs=pl.BlockSpec((1, tm), lambda i: (0, i)),
            scratch_shapes=[
                pltpu.VMEM((tm, K1P), jnp.bfloat16),   # widened x
                pltpu.VMEM((tm, OUT_P), jnp.float32),  # widened action mask
            ],
        ),
        compiler_params=pltpu.CompilerParams(
            dimension_semantics=("parallel",)),
        cost_estimate=pl.CostEstimate(flops=flops, transcendentals=0,
                                      bytes_accessed=bytes_accessed),
    )(x, y, w1p, b1p, w2p, b2p, w3p, b3p)

    idx = out[0, :B]
    return idx[0] if single else idx


if __name__ == "__main__":
    key = jax.random.PRNGKey(0)
    ks = jax.random.split(key, 8)

    # Deterministic synthetic parameters (shapes from the module __init__).
    w1 = jax.random.normal(ks[0], (IN_F, HID), jnp.float32) * 0.1
    b1 = jax.random.normal(ks[1], (HID,), jnp.float32) * 0.1
    w2 = jax.random.normal(ks[2], (HID, HID), jnp.float32) * 0.05
    b2 = jax.random.normal(ks[3], (HID,), jnp.float32) * 0.1
    w3 = jax.random.normal(ks[4], (HID, OUT_F), jnp.float32) * 0.1
    b3 = jax.random.normal(ks[5], (OUT_F,), jnp.float32) * 0.1

    padded_params = prepare_params((w1, b1, w2, b2, w3, b3))

    # Batched example inputs: 256 boards, x (B, 9), action mask y (B, 10).
    B = 256
    x = jax.random.uniform(ks[6], (B, IN_F), jnp.float32, minval=-1.0, maxval=1.0)
    y = (jax.random.uniform(ks[7], (B, OUT_F), jnp.float32) > 0.3).astype(jnp.float32)

    idx = model_export_forward(x, y, padded_params)
    jax.block_until_ready(idx)
    print("KERNEL_OK")
</pallas_src>

<mosaic_0001>
module attributes {stable_mosaic.version = 11 : i64} {
  func.func @_policy_kernel(%arg0: i32, %arg1: memref<128x9xf32, #tpu.memory_space<vmem>>, %arg2: memref<128x10xf32, #tpu.memory_space<vmem>>, %arg3: memref<16x256xbf16, #tpu.memory_space<vmem>>, %arg4: memref<1x256xf32, #tpu.memory_space<vmem>>, %arg5: memref<256x256xbf16, #tpu.memory_space<vmem>>, %arg6: memref<1x256xf32, #tpu.memory_space<vmem>>, %arg7: memref<256x128xbf16, #tpu.memory_space<vmem>>, %arg8: memref<1x128xf32, #tpu.memory_space<vmem>>, %arg9: memref<1x128xi32, #tpu.memory_space<vmem>>, %arg10: memref<128x16xbf16, #tpu.memory_space<vmem>>, %arg11: memref<128x128xf32, #tpu.memory_space<vmem>>) attributes {dimension_semantics = [#tpu.dimension_semantics<parallel>], iteration_bounds = array<i64: 2>, scalar_prefetch = 0 : i64, scratch_operands = 2 : i64, tpu.core_type = #tpu.core_type<tc>, window_params = [{transform_indices = @transform_0, window_bounds = array<i64: 128, 9>}, {transform_indices = @transform_1, window_bounds = array<i64: 128, 10>}, {pipeline_mode = #tpu.pipeline_mode<synchronous>, transform_indices = @transform_2, window_bounds = array<i64: 16, 256>}, {pipeline_mode = #tpu.pipeline_mode<synchronous>, transform_indices = @transform_3, window_bounds = array<i64: 1, 256>}, {pipeline_mode = #tpu.pipeline_mode<synchronous>, transform_indices = @transform_4, window_bounds = array<i64: 256, 256>}, {pipeline_mode = #tpu.pipeline_mode<synchronous>, transform_indices = @transform_5, window_bounds = array<i64: 1, 256>}, {pipeline_mode = #tpu.pipeline_mode<synchronous>, transform_indices = @transform_6, window_bounds = array<i64: 256, 128>}, {pipeline_mode = #tpu.pipeline_mode<synchronous>, transform_indices = @transform_7, window_bounds = array<i64: 1, 128>}, {transform_indices = @transform_8, window_bounds = array<i64: 1, 128>}]} {
    %cst = arith.constant 0.000000e+00 : bf16
    %0 = vector.broadcast %cst : bf16 to vector<128x16xbf16>
    %c0 = arith.constant 0 : index
    %c0_0 = arith.constant 0 : index
    %1 = vector.load %arg10[%c0, %c0_0] : memref<128x16xbf16, #tpu.memory_space<vmem>>, vector<128x16xbf16>
    tpu.vector_store %arg10[%c0, %c0_0], %0 {strides = array<i32>} : memref<128x16xbf16, #tpu.memory_space<vmem>>, vector<128x16xbf16>,
    %c0_1 = arith.constant 0 : index
    %c0_2 = arith.constant 0 : index
    %2 = vector.load %arg1[%c0_1, %c0_2] : memref<128x9xf32, #tpu.memory_space<vmem>>, vector<128x9xf32>
    %3 = arith.truncf %2 : vector<128x9xf32> to vector<128x9xbf16>
    %c0_3 = arith.constant 0 : index
    %c0_4 = arith.constant 0 : index
    %4 = vector.load %arg10[%c0_3, %c0_4] : memref<128x16xbf16, #tpu.memory_space<vmem>>, vector<128x9xbf16>
    tpu.vector_store %arg10[%c0_3, %c0_4], %3 {strides = array<i32>} : memref<128x16xbf16, #tpu.memory_space<vmem>>, vector<128x9xbf16>,
    %cst_5 = arith.constant 0.000000e+00 : f32
    %5 = vector.broadcast %cst_5 : f32 to vector<128x128xf32>
    %c0_6 = arith.constant 0 : index
    %c0_7 = arith.constant 0 : index
    %6 = vector.load %arg11[%c0_6, %c0_7] : memref<128x128xf32, #tpu.memory_space<vmem>>, vector<128x128xf32>
    tpu.vector_store %arg11[%c0_6, %c0_7], %5 {strides = array<i32>} : memref<128x128xf32, #tpu.memory_space<vmem>>, vector<128x128xf32>,
    %c0_8 = arith.constant 0 : index
    %c0_9 = arith.constant 0 : index
    %7 = vector.load %arg2[%c0_8, %c0_9] : memref<128x10xf32, #tpu.memory_space<vmem>>, vector<128x10xf32>
    %c0_10 = arith.constant 0 : index
    %c0_11 = arith.constant 0 : index
    %8 = vector.load %arg11[%c0_10, %c0_11] : memref<128x128xf32, #tpu.memory_space<vmem>>, vector<128x10xf32>
    tpu.vector_store %arg11[%c0_10, %c0_11], %7 {strides = array<i32>} : memref<128x128xf32, #tpu.memory_space<vmem>>, vector<128x10xf32>,
    %c0_12 = arith.constant 0 : index
    %c0_13 = arith.constant 0 : index
    %9 = vector.load %arg10[%c0_12, %c0_13] : memref<128x16xbf16, #tpu.memory_space<vmem>>, vector<128x16xbf16>
    %c0_14 = arith.constant 0 : index
    %c0_15 = arith.constant 0 : index
    %10 = vector.load %arg3[%c0_14, %c0_15] : memref<16x256xbf16, #tpu.memory_space<vmem>>, vector<16x256xbf16>
    %cst_16 = arith.constant dense<0.000000e+00> : vector<128x256xf32>
    %11 = tpu.matmul %9, %10, %cst_16 {dimension_numbers = #tpu.dot_dimension_numbers<[1], [0], [0], [1], [0, 0, 1, 1], [], []>} : vector<128x16xbf16>, vector<16x256xbf16>, vector<128x256xf32> -> vector<128x256xf32>
    %c0_17 = arith.constant 0 : index
    %c0_18 = arith.constant 0 : index
    %12 = vector.load %arg4[%c0_17, %c0_18] : memref<1x256xf32, #tpu.memory_space<vmem>>, vector<1x256xf32>
    %13 = vector.broadcast %12 : vector<1x256xf32> to vector<128x256xf32>
    %14 = arith.addf %11, %13 : vector<128x256xf32>
    %cst_19 = arith.constant 0.000000e+00 : f32
    %15 = vector.broadcast %cst_19 : f32 to vector<128x256xf32>
    %16 = arith.maximumf %14, %15 : vector<128x256xf32>
    %17 = arith.truncf %16 : vector<128x256xf32> to vector<128x256xbf16>
    %c0_20 = arith.constant 0 : index
    %c0_21 = arith.constant 0 : index
    %18 = vector.load %arg5[%c0_20, %c0_21] : memref<256x256xbf16, #tpu.memory_space<vmem>>, vector<256x256xbf16>
    %cst_22 = arith.constant dense<0.000000e+00> : vector<128x256xf32>
    %19 = tpu.matmul %17, %18, %cst_22 {dimension_numbers = #tpu.dot_dimension_numbers<[1], [0], [0], [1], [0, 0, 1, 1], [], []>} : vector<128x256xbf16>, vector<256x256xbf16>, vector<128x256xf32> -> vector<128x256xf32>
    %c0_23 = arith.constant 0 : index
    %c0_24 = arith.constant 0 : index
    %20 = vector.load %arg6[%c0_23, %c0_24] : memref<1x256xf32, #tpu.memory_space<vmem>>, vector<1x256xf32>
    %21 = vector.broadcast %20 : vector<1x256xf32> to vector<128x256xf32>
    %22 = arith.addf %19, %21 : vector<128x256xf32>
    %cst_25 = arith.constant 0.000000e+00 : f32
    %23 = vector.broadcast %cst_25 : f32 to vector<128x256xf32>
    %24 = arith.maximumf %22, %23 : vector<128x256xf32>
    %25 = arith.truncf %24 : vector<128x256xf32> to vector<128x256xbf16>
    %c0_26 = arith.constant 0 : index
    %c0_27 = arith.constant 0 : index
    %26 = vector.load %arg7[%c0_26, %c0_27] : memref<256x128xbf16, #tpu.memory_space<vmem>>, vector<256x128xbf16>
    %cst_28 = arith.constant dense<0.000000e+00> : vector<128x128xf32>
    %27 = tpu.matmul %25, %26, %cst_28 {dimension_numbers = #tpu.dot_dimension_numbers<[1], [0], [0], [1], [0, 0, 1, 1], [], []>} : vector<128x256xbf16>, vector<256x128xbf16>, vector<128x128xf32> -> vector<128x128xf32>
    %c0_29 = arith.constant 0 : index
    %c0_30 = arith.constant 0 : index
    %28 = vector.load %arg8[%c0_29, %c0_30] : memref<1x128xf32, #tpu.memory_space<vmem>>, vector<1x128xf32>
    %29 = vector.broadcast %28 : vector<1x128xf32> to vector<128x128xf32>
    %30 = arith.addf %27, %29 : vector<128x128xf32>
    %c0_31 = arith.constant 0 : index
    %c0_32 = arith.constant 0 : index
    %31 = vector.load %arg11[%c0_31, %c0_32] : memref<128x128xf32, #tpu.memory_space<vmem>>, vector<128x128xf32>
    %cst_33 = arith.constant 0.000000e+00 : f32
    %32 = vector.broadcast %cst_33 : f32 to vector<128x128xf32>
    %33 = arith.cmpf oeq, %31, %32 : vector<128x128xf32>
    %cst_34 = arith.constant -3.400000e+38 : f32
    %34 = vector.broadcast %cst_34 : f32 to vector<128x128xf32>
    %35 = arith.select %33, %34, %30 : vector<128x128xi1>, vector<128x128xf32>
    %cst_35 = arith.constant dense<0xFF800000> : vector<128xf32>
    %36 = vector.multi_reduction <maximumf>, %35, %cst_35 [1] : vector<128x128xf32> to vector<128xf32>
    %37 = vector.shape_cast %36 : vector<128xf32> to vector<128x1xf32>
    %38 = tpu.iota {dimensions = array<i32: 1>} : vector<128x128xi32>
    %39 = vector.broadcast %37 : vector<128x1xf32> to vector<128x128xf32>
    %40 = arith.cmpf oeq, %35, %39 : vector<128x128xf32>
    %c1073741824_i32 = arith.constant 1073741824 : i32
    %41 = vector.broadcast %c1073741824_i32 : i32 to vector<128x128xi32>
    %42 = arith.select %40, %38, %41 : vector<128x128xi1>, vector<128x128xi32>
    %cst_36 = arith.constant dense<2147483647> : vector<128xi32>
    %43 = vector.multi_reduction <minsi>, %42, %cst_36 [1] : vector<128x128xi32> to vector<128xi32>
    %44 = vector.shape_cast %43 : vector<128xi32> to vector<1x128xi32>
    %c0_37 = arith.constant 0 : index
    %c0_38 = arith.constant 0 : index
    %45 = vector.load %arg9[%c0_37, %c0_38] : memref<1x128xi32, #tpu.memory_space<vmem>>, vector<1x128xi32>
    tpu.vector_store %arg9[%c0_37, %c0_38], %44 {strides = array<i32>} : memref<1x128xi32, #tpu.memory_space<vmem>>, vector<1x128xi32>,
    return
  }
  func.func @transform_0(%arg0: i32) -> (i32, i32) {
    %c0_i32 = arith.constant 0 : i32
    %c0_i32_0 = arith.constant 0 : i32
    return %arg0, %c0_i32 : i32, i32
  }
  func.func @transform_1(%arg0: i32) -> (i32, i32) {
    %c0_i32 = arith.constant 0 : i32
    %c0_i32_0 = arith.constant 0 : i32
    return %arg0, %c0_i32 : i32, i32
  }
  func.func @transform_2(%arg0: i32) -> (i32, i32) {
    %c0_i32 = arith.constant 0 : i32
    %c0_i32_0 = arith.constant 0 : i32
    %c0_i32_1 = arith.constant 0 : i32
    return %c0_i32, %c0_i32_0 : i32, i32
  }
  func.func @transform_3(%arg0: i32) -> (i32, i32) {
    %c0_i32 = arith.constant 0 : i32
    %c0_i32_0 = arith.constant 0 : i32
    %c0_i32_1 = arith.constant 0 : i32
    return %c0_i32, %c0_i32_0 : i32, i32
  }
  func.func @transform_4(%arg0: i32) -> (i32, i32) {
    %c0_i32 = arith.constant 0 : i32
    %c0_i32_0 = arith.constant 0 : i32
    %c0_i32_1 = arith.constant 0 : i32
    return %c0_i32, %c0_i32_0 : i32, i32
  }
  func.func @transform_5(%arg0: i32) -> (i32, i32) {
    %c0_i32 = arith.constant 0 : i32
    %c0_i32_0 = arith.constant 0 : i32
    %c0_i32_1 = arith.constant 0 : i32
    return %c0_i32, %c0_i32_0 : i32, i32
  }
  func.func @transform_6(%arg0: i32) -> (i32, i32) {
    %c0_i32 = arith.constant 0 : i32
    %c0_i32_0 = arith.constant 0 : i32
    %c0_i32_1 = arith.constant 0 : i32
    return %c0_i32, %c0_i32_0 : i32, i32
  }
  func.func @transform_7(%arg0: i32) -> (i32, i32) {
    %c0_i32 = arith.constant 0 : i32
    %c0_i32_0 = arith.constant 0 : i32
    %c0_i32_1 = arith.constant 0 : i32
    return %c0_i32, %c0_i32_0 : i32, i32
  }
  func.func @transform_8(%arg0: i32) -> (i32, i32) {
    %c0_i32 = arith.constant 0 : i32
    %c0_i32_0 = arith.constant 0 : i32
    return %c0_i32, %arg0 : i32, i32
  }
}

</mosaic_0001>

<llo_original>
// kernel: model_export_forward.1
$region0: #{model_export_forward.1}
  #allocation0 [shape = 'u32[]', space=smem, size = 0x4, offset = 0x4, fixed_abs, tag = 'smem constant byte address 0x4 - core index']
  #allocation1 [shape = 'u32[72,128]{1,0:T(1,128)}', space=vmem, size = 0x9000, scoped, tag = 'internal scratch']
  #allocation2 [shape = 'bf16[128,16]{1,0:T(8,128)(2,1)}', space=vmem, size = 0x8000, scoped, tag = 'scratch operand']
  #allocation3 [shape = 'f32[128,128]{1,0:T(8,128)}', space=vmem, size = 0x10000, scoped, tag = 'scratch operand']
  %s0 = inlined_call_operand.vmem [shape: f32[256,9], index: 0, kind: input, shape index: {}]
  %s1 = inlined_call_operand.vmem [shape: f32[256,10], index: 1, kind: input, shape index: {}]
  %s2 = inlined_call_operand.vmem [shape: bf16[16,256], index: 2, kind: input, shape index: {}]
  %s3 = inlined_call_operand.vmem [shape: f32[1,256], index: 3, kind: input, shape index: {}]
  %s4 = inlined_call_operand.vmem [shape: bf16[256,256], index: 4, kind: input, shape index: {}]
  %s5 = inlined_call_operand.vmem [shape: f32[1,256], index: 5, kind: input, shape index: {}]
  %s6 = inlined_call_operand.vmem [shape: bf16[256,128], index: 6, kind: input, shape index: {}]
  %s7 = inlined_call_operand.vmem [shape: f32[1,128], index: 7, kind: input, shape index: {}]
  %s8 = inlined_call_operand.hbm [shape: s32[1,256], index: 8, kind: output, shape index: {}]
  %s9 = sld [smem:[#allocation0]]
  $region65: #{model_export_forward.1} parent=0
    _
  %s11 = ssub.s32 1, %s9
  %s12 = scalar_select 0, %s11, %s9
  $region1: #{model_export_forward.1} parent=0
    #allocation4 [shape = 'u8[1024]{0}', space=vmem, size = 0x400, scoped, tag = 'output window, operand 0']
    #allocation5 [shape = 's32[2]{0}', space=sflag, size = 0x8, scoped, tag = 'scoped memory for model_export_forward.1']
    %13 = vsyncpa [#allocation5], 0
    %s14 = scalar_lea.sflag [#allocation5], 1
    %15 = vsyncpa %s14, 0
    loop: start=0, step=1, limit=4
    $region2: #{model_export_forward.1} parent=1 // loop_pre_header
      _
    $region3: #{model_export_forward.1} parent=1 // loop_header
      %s17 = sphi 0, %s21
      %p18 = scmp.ge.s32.totalorder %s17, 4
      %s27 = sphi 0, %s29
      %s30 = sphi 0, %s27
      %s31 = sphi 0, %s30
      %s47 = sphi 0, %s31
      %s53 = sphi 0, %s55
      %s56 = sphi 0, %s53
      %s57 = sphi 0, %s56
      %s73 = sphi 0, %s57
      %s77 = sphi 0, %s77
      %s79 = sphi 0, %s77
      %s80 = sphi 0, %s79
      %s94 = sphi 0, %s80
      %s98 = sphi 0, %s98
      %s100 = sphi 0, %s98
      %s101 = sphi 0, %s100
      %s115 = sphi 0, %s101
      %s119 = sphi 0, %s119
      %s121 = sphi 0, %s119
      %s122 = sphi 0, %s121
      %s136 = sphi 0, %s122
      %s140 = sphi 0, %s140
      %s142 = sphi 0, %s140
      %s143 = sphi 0, %s142
      %s157 = sphi 0, %s143
      %s161 = sphi 0, %s161
      %s163 = sphi 0, %s161
      %s164 = sphi 0, %s163
      %s178 = sphi 0, %s164
      %s182 = sphi 0, %s182
      %s184 = sphi 0, %s182
      %s185 = sphi 0, %s184
      %s199 = sphi 0, %s185
      %s205 = sphi 0, %s207
      %s208 = sphi 0, %s205
      %s209 = sphi 0, %s208
      %s225 = sphi 0, %s209
    $region4: #{model_export_forward.1} parent=1 // loop_header_branch
      %20 = sbr.rel (%p18) target = $region8
    $region5: #{model_export_forward.1} parent=1 // loop_body
      %s22 = ssub.s32 %s17, 1
      %s23 = ssub.s32 %s17, 2
      %s24 = sadd.s32 %s17, 1
      %s25 = ssub.s32 %s17, %s24
      %p26 = scmp.eq.s32.totalorder %s25, 0
      %s28 = sadd.s32 %s27, 1
      %s29 = scalar_select %p26, %s27, %s28
      %p32 = pneg %p26
      %p33 = scmp.eq.s32.totalorder %s17, 1
      %p34 = por %p32, %p33
      %p35 = scmp.ne.s32.totalorder %s27, %s30
      %p36 = scmp.eq.s32.totalorder %s17, 0
      %p37 = por %p35, %p36
      %p38 = scmp.ne.s32.totalorder %s27, %s30
      %p39 = scmp.eq.s32.totalorder %s22, 1
      %p40 = por %p38, %p39
      %p41 = scmp.ne.s32.totalorder %s30, %s31
      %p42 = scmp.eq.s32.totalorder %s22, 0
      %p43 = por %p41, %p42
      %p44 = scmp.ne.s32.totalorder %s30, %s31
      %p45 = scmp.eq.s32.totalorder %s23, 1
      %p46 = por %p44, %p45
      %p48 = scmp.ne.s32.totalorder %s31, %s47
      %p49 = scmp.eq.s32.totalorder %s23, 0
      %p50 = por %p48, %p49
      %s51 = ssub.s32 %s17, %s24
      %p52 = scmp.eq.s32.totalorder %s51, 0
      %s54 = sadd.s32 %s53, 1
      %s55 = scalar_select %p52, %s53, %s54
      %p58 = pneg %p52
      %p59 = scmp.eq.s32.totalorder %s17, 1
      %p60 = por %p58, %p59
      %p61 = scmp.ne.s32.totalorder %s53, %s56
      %p62 = scmp.eq.s32.totalorder %s17, 0
      %p63 = por %p61, %p62
      %p64 = scmp.ne.s32.totalorder %s53, %s56
      %p65 = scmp.eq.s32.totalorder %s22, 1
      %p66 = por %p64, %p65
      %p67 = scmp.ne.s32.totalorder %s56, %s57
      %p68 = scmp.eq.s32.totalorder %s22, 0
      %p69 = por %p67, %p68
      %p70 = scmp.ne.s32.totalorder %s56, %s57
      %p71 = scmp.eq.s32.totalorder %s23, 1
      %p72 = por %p70, %p71
      %p74 = scmp.ne.s32.totalorder %s57, %s73
      %p75 = scmp.eq.s32.totalorder %s23, 0
      %p76 = por %p74, %p75
      %s78 = sadd.s32 %s77, 1
      %p81 = scmp.eq.s32.totalorder %s17, 1
      %p82 = scmp.ne.s32.totalorder %s77, %s79
      %p83 = scmp.eq.s32.totalorder %s17, 0
      %p84 = por %p82, %p83
      %p85 = scmp.ne.s32.totalorder %s77, %s79
      %p86 = scmp.eq.s32.totalorder %s22, 1
      %p87 = por %p85, %p86
      %p88 = scmp.ne.s32.totalorder %s79, %s80
      %p89 = scmp.eq.s32.totalorder %s22, 0
      %p90 = por %p88, %p89
      %p91 = scmp.ne.s32.totalorder %s79, %s80
      %p92 = scmp.eq.s32.totalorder %s23, 1
      %p93 = por %p91, %p92
      %p95 = scmp.ne.s32.totalorder %s80, %s94
      %p96 = scmp.eq.s32.totalorder %s23, 0
      %p97 = por %p95, %p96
      %s99 = sadd.s32 %s98, 1
      %p102 = scmp.eq.s32.totalorder %s17, 1
      %p103 = scmp.ne.s32.totalorder %s98, %s100
      %p104 = scmp.eq.s32.totalorder %s17, 0
      %p105 = por %p103, %p104
      %p106 = scmp.ne.s32.totalorder %s98, %s100
      %p107 = scmp.eq.s32.totalorder %s22, 1
      %p108 = por %p106, %p107
      %p109 = scmp.ne.s32.totalorder %s100, %s101
      %p110 = scmp.eq.s32.totalorder %s22, 0
      %p111 = por %p109, %p110
      %p112 = scmp.ne.s32.totalorder %s100, %s101
      %p113 = scmp.eq.s32.totalorder %s23, 1
      %p114 = por %p112, %p113
      %p116 = scmp.ne.s32.totalorder %s101, %s115
      %p117 = scmp.eq.s32.totalorder %s23, 0
      %p118 = por %p116, %p117
      %s120 = sadd.s32 %s119, 1
      %p123 = scmp.eq.s32.totalorder %s17, 1
      %p124 = scmp.ne.s32.totalorder %s119, %s121
      %p125 = scmp.eq.s32.totalorder %s17, 0
      %p126 = por %p124, %p125
      %p127 = scmp.ne.s32.totalorder %s119, %s121
      %p128 = scmp.eq.s32.totalorder %s22, 1
      %p129 = por %p127, %p128
      %p130 = scmp.ne.s32.totalorder %s121, %s122
      %p131 = scmp.eq.s32.totalorder %s22, 0
      %p132 = por %p130, %p131
      %p133 = scmp.ne.s32.totalorder %s121, %s122
      %p134 = scmp.eq.s32.totalorder %s23, 1
      %p135 = por %p133, %p134
      %p137 = scmp.ne.s32.totalorder %s122, %s136
      %p138 = scmp.eq.s32.totalorder %s23, 0
      %p139 = por %p137, %p138
      %s141 = sadd.s32 %s140, 1
      %p144 = scmp.eq.s32.totalorder %s17, 1
      %p145 = scmp.ne.s32.totalorder %s140, %s142
      %p146 = scmp.eq.s32.totalorder %s17, 0
      %p147 = por %p145, %p146
      %p148 = scmp.ne.s32.totalorder %s140, %s142
      %p149 = scmp.eq.s32.totalorder %s22, 1
      %p150 = por %p148, %p149
      %p151 = scmp.ne.s32.totalorder %s142, %s143
      %p152 = scmp.eq.s32.totalorder %s22, 0
      %p153 = por %p151, %p152
      %p154 = scmp.ne.s32.totalorder %s142, %s143
      %p155 = scmp.eq.s32.totalorder %s23, 1
      %p156 = por %p154, %p155
      %p158 = scmp.ne.s32.totalorder %s143, %s157
      %p159 = scmp.eq.s32.totalorder %s23, 0
      %p160 = por %p158, %p159
      %s162 = sadd.s32 %s161, 1
      %p165 = scmp.eq.s32.totalorder %s17, 1
      %p166 = scmp.ne.s32.totalorder %s161, %s163
      %p167 = scmp.eq.s32.totalorder %s17, 0
      %p168 = por %p166, %p167
      %p169 = scmp.ne.s32.totalorder %s161, %s163
      %p170 = scmp.eq.s32.totalorder %s22, 1
      %p171 = por %p169, %p170
      %p172 = scmp.ne.s32.totalorder %s163, %s164
      %p173 = scmp.eq.s32.totalorder %s22, 0
      %p174 = por %p172, %p173
      %p175 = scmp.ne.s32.totalorder %s163, %s164
      %p176 = scmp.eq.s32.totalorder %s23, 1
      %p177 = por %p175, %p176
      %p179 = scmp.ne.s32.totalorder %s164, %s178
      %p180 = scmp.eq.s32.totalorder %s23, 0
      %p181 = por %p179, %p180
      %s183 = sadd.s32 %s182, 1
      %p186 = scmp.eq.s32.totalorder %s17, 1
      %p187 = scmp.ne.s32.totalorder %s182, %s184
      %p188 = scmp.eq.s32.totalorder %s17, 0
      %p189 = por %p187, %p188
      %p190 = scmp.ne.s32.totalorder %s182, %s184
      %p191 = scmp.eq.s32.totalorder %s22, 1
      %p192 = por %p190, %p191
      %p193 = scmp.ne.s32.totalorder %s184, %s185
      %p194 = scmp.eq.s32.totalorder %s22, 0
      %p195 = por %p193, %p194
      %p196 = scmp.ne.s32.totalorder %s184, %s185
      %p197 = scmp.eq.s32.totalorder %s23, 1
      %p198 = por %p196, %p197
      %p200 = scmp.ne.s32.totalorder %s185, %s199
      %p201 = scmp.eq.s32.totalorder %s23, 0
      %p202 = por %p200, %p201
      %s203 = ssub.s32 %s17, %s24
      %p204 = scmp.eq.s32.totalorder %s203, 0
      %s206 = sadd.s32 %s205, 1
      %s207 = scalar_select %p204, %s205, %s206
      %p210 = pneg %p204
      %p211 = scmp.eq.s32.totalorder %s17, 1
      %p212 = por %p210, %p211
      %p213 = scmp.ne.s32.totalorder %s205, %s208
      %p214 = scmp.eq.s32.totalorder %s17, 0
      %p215 = por %p213, %p214
      %p216 = scmp.ne.s32.totalorder %s205, %s208
      %p217 = scmp.eq.s32.totalorder %s22, 1
      %p218 = por %p216, %p217
      %p219 = scmp.ne.s32.totalorder %s208, %s209
      %p220 = scmp.eq.s32.totalorder %s22, 0
      %p221 = por %p219, %p220
      %p222 = scmp.ne.s32.totalorder %s208, %s209
      %p223 = scmp.eq.s32.totalorder %s23, 1
      %p224 = por %p222, %p223
      %p226 = scmp.ne.s32.totalorder %s209, %s225
      %p227 = scmp.eq.s32.totalorder %s23, 0
      %p228 = por %p226, %p227
      %p229 = scmp.le.s32.totalorder 1, %s17
      %p230 = scmp.lt.s32.totalorder %s17, 3
      %p231 = pnand %p229, %p230
      %p232 = pneg %p231
      // Predicated region
      $region9: #{model_export_forward.1} parent=5 // pred_check
        _
      $region10: #{model_export_forward.1} parent=5 // pred_check_branch
        %234 = sbr.rel (%p231) target = $region12
      $region11: #{model_export_forward.1} parent=5 // pred_region
        %s235 = ssub.s32 %s17, 1
        // Predicated region
        $region13: #{model_export_forward.1} parent=11 // pred_check
          %p236 = pneg %p90
        $region14: #{model_export_forward.1} parent=11 // pred_check_branch
          %238 = sbr.rel (%p236) target = $region16
        $region15: #{model_export_forward.1} parent=11 // pred_region
          _
        $region16: #{model_export_forward.1} parent=11 // pred_fallthru
          _
        // Predicated region
        $region17: #{model_export_forward.1} parent=11 // pred_check
          %p239 = pneg %p111
        $region18: #{model_export_forward.1} parent=11 // pred_check_branch
          %241 = sbr.rel (%p239) target = $region20
        $region19: #{model_export_forward.1} parent=11 // pred_region
          _
        $region20: #{model_export_forward.1} parent=11 // pred_fallthru
          _
        // Predicated region
        $region21: #{model_export_forward.1} parent=11 // pred_check
          %p242 = pneg %p132
        $region22: #{model_export_forward.1} parent=11 // pred_check_branch
          %244 = sbr.rel (%p242) target = $region24
        $region23: #{model_export_forward.1} parent=11 // pred_region
          _
        $region24: #{model_export_forward.1} parent=11 // pred_fallthru
          _
        // Predicated region
        $region25: #{model_export_forward.1} parent=11 // pred_check
          %p245 = pneg %p153
        $region26: #{model_export_forward.1} parent=11 // pred_check_branch
          %247 = sbr.rel (%p245) target = $region28
        $region27: #{model_export_forward.1} parent=11 // pred_region
          _
        $region28: #{model_export_forward.1} parent=11 // pred_fallthru
          _
        // Predicated region
        $region29: #{model_export_forward.1} parent=11 // pred_check
          %p248 = pneg %p174
        $region30: #{model_export_forward.1} parent=11 // pred_check_branch
          %250 = sbr.rel (%p248) target = $region32
        $region31: #{model_export_forward.1} parent=11 // pred_region
          _
        $region32: #{model_export_forward.1} parent=11 // pred_fallthru
          _
        // Predicated region
        $region33: #{model_export_forward.1} parent=11 // pred_check
          %p251 = pneg %p195
        $region34: #{model_export_forward.1} parent=11 // pred_check_branch
          %253 = sbr.rel (%p251) target = $region36
        $region35: #{model_export_forward.1} parent=11 // pred_region
          _
        $region36: #{model_export_forward.1} parent=11 // pred_fallthru
          _
      $region12: #{model_export_forward.1} parent=5 // pred_fallthru
        _
      %p254 = scmp.lt.s32.totalorder %s17, 2
      // Predicated region
      $region37: #{model_export_forward.1} parent=5 // pred_check
        %p255 = pneg %p254
      $region38: #{model_export_forward.1} parent=5 // pred_check_branch
        %257 = sbr.rel (%p255) target = $region40
      $region39: #{model_export_forward.1} parent=5 // pred_region
        // Predicated region
        $region41: #{model_export_forward.1} parent=39 // pred_check
          %p258 = pneg %p37
        $region42: #{model_export_forward.1} parent=39 // pred_check_branch
          %260 = sbr.rel (%p258) target = $region44
        $region43: #{model_export_forward.1} parent=39 // pred_region
          %s261 = smul.u32 16, %s17
          %p262 = scmp.lt.s32.totalorder %s261, 31
          %s263 = scalar_select %p262, %s261, 31
          %s264 = smul.addr %s263, 8
          %s265 = scalar_lea.vmem %s0, %s264
          %s266 = smul.u32 16, %s17
        $region44: #{model_export_forward.1} parent=39 // pred_fallthru
          _
        // Predicated region
        $region45: #{model_export_forward.1} parent=39 // pred_check
          %p267 = pneg %p63
        $region46: #{model_export_forward.1} parent=39 // pred_check_branch
          %269 = sbr.rel (%p267) target = $region48
        $region47: #{model_export_forward.1} parent=39 // pred_region
          %s270 = smul.u32 16, %s17
          %p271 = scmp.lt.s32.totalorder %s270, 31
          %s272 = scalar_select %p271, %s270, 31
          %s273 = smul.addr %s272, 8
          %s274 = scalar_lea.vmem %s1, %s273
          %s275 = smul.u32 16, %s17
        $region48: #{model_export_forward.1} parent=39 // pred_fallthru
          _
      $region40: #{model_export_forward.1} parent=5 // pred_fallthru
        _
      %p276 = scmp.le.s32.totalorder 1, %s17
      %p277 = scmp.lt.s32.totalorder %s17, 3
      %p278 = pnand %p276, %p277
      %p279 = pneg %p278
      // Predicated region
      $region49: #{model_export_forward.1} parent=5 // pred_check
        _
      $region50: #{model_export_forward.1} parent=5 // pred_check_branch
        %281 = sbr.rel (%p278) target = $region52
      $region51: #{model_export_forward.1} parent=5 // pred_region
        %s282 = ssub.s32 %s17, 1
        %s283 = smul.u32 16, %s22
        %p284 = scmp.lt.s32.totalorder %s283, 31
        %s285 = scalar_select %p284, %s283, 31
        %s286 = smul.addr %s285, 8
        %s287 = scalar_lea.vmem %s0, %s286
        %p288 = pneg %p43
        %p289 = pneg %p40
        %s290 = smul.u32 16, %s22
        %p291 = scmp.lt.s32.totalorder %s290, 31
        %s292 = scalar_select %p291, %s290, 31
        %s293 = smul.addr %s292, 8
        %s294 = scalar_lea.vmem %s1, %s293
        %p295 = pneg %p69
        %p296 = pneg %p66
        %p297 = pneg %p90
        %p298 = pneg %p87
        %p299 = pneg %p111
        %p300 = pneg %p108
        %p301 = pneg %p132
        %p302 = pneg %p129
        %p303 = pneg %p153
        %p304 = pneg %p150
        %p305 = pneg %p174
        %p306 = pneg %p171
        %p307 = pneg %p195
        %p308 = pneg %p192
        %p309 = pneg %p221
        %p310 = pneg %p218
        %s311 = sand.u32 %s208, 1
        %s312 = scalar_lea.sflag [#allocation5], %s311
        %s313 = sand.u32 %s208, 1
        %s314 = scalar_lea.vmem [#allocation4], %s313
        %s315 = smul.u32 16, %s22
        %p316 = scmp.lt.s32.totalorder %s315, 31
        %s317 = scalar_select %p316, %s315, 31
        %s318 = smul.addr %s317, 8
        %s319 = scalar_lea.vmem %s0, %s318
        %s320 = smul.u32 16, %s22
        %s321 = smul.u32 16, %s22
        %p322 = scmp.lt.s32.totalorder %s321, 31
        %s323 = scalar_select %p322, %s321, 31
        %s324 = smul.addr %s323, 8
        %s325 = scalar_lea.vmem %s1, %s324
        %s326 = smul.u32 16, %s22
        %vm328 = vcmask 125952
        %329 = vst.msk [vmem:[#allocation2] sm:$0xf] %vm328, 0
        %330 = vst.msk [vmem:[#allocation2 + $0x4] sm:$0xf] %vm328, 0
        %331 = vst.msk [vmem:[#allocation2 + $0x8] sm:$0xf] %vm328, 0
        %332 = vst.msk [vmem:[#allocation2 + $0xc] sm:$0xf] %vm328, 0
        %333 = vst.msk [vmem:[#allocation2 + $0x10] sm:$0xf] %vm328, 0
        %334 = vst.msk [vmem:[#allocation2 + $0x14] sm:$0xf] %vm328, 0
        %335 = vst.msk [vmem:[#allocation2 + $0x18] sm:$0xf] %vm328, 0
        %336 = vst.msk [vmem:[#allocation2 + $0x1c] sm:$0xf] %vm328, 0
        %337 = vst.msk [vmem:[#allocation2 + $0x20] sm:$0xf] %vm328, 0
        %338 = vst.msk [vmem:[#allocation2 + $0x24] sm:$0xf] %vm328, 0
        %339 = vst.msk [vmem:[#allocation2 + $0x28] sm:$0xf] %vm328, 0
        %340 = vst.msk [vmem:[#allocation2 + $0x2c] sm:$0xf] %vm328, 0
        %341 = vst.msk [vmem:[#allocation2 + $0x30] sm:$0xf] %vm328, 0
        %342 = vst.msk [vmem:[#allocation2 + $0x34] sm:$0xf] %vm328, 0
        %343 = vst.msk [vmem:[#allocation2 + $0x38] sm:$0xf] %vm328, 0
        %344 = vst.msk [vmem:[#allocation2 + $0x3c] sm:$0xf] %vm328, 0
        %v345 = vld [vmem:[%s319] sm:$0xff]
        %v346 = vld [vmem:[%s319 + $0x8] sm:$0xff]
        %v347 = vld [vmem:[%s319 + $0x10] sm:$0xff]
        %v348 = vld [vmem:[%s319 + $0x18] sm:$0xff]
        %v349 = vld [vmem:[%s319 + $0x20] sm:$0xff]
        %v350 = vld [vmem:[%s319 + $0x28] sm:$0xff]
        %v351 = vld [vmem:[%s319 + $0x30] sm:$0xff]
        %v352 = vld [vmem:[%s319 + $0x38] sm:$0xff]
        %v353 = vld [vmem:[%s319 + $0x40] sm:$0xff]
        %v354 = vld [vmem:[%s319 + $0x48] sm:$0xff]
        %v355 = vld [vmem:[%s319 + $0x50] sm:$0xff]
        %v356 = vld [vmem:[%s319 + $0x58] sm:$0xff]
        %v357 = vld [vmem:[%s319 + $0x60] sm:$0xff]
        %v358 = vld [vmem:[%s319 + $0x68] sm:$0xff]
        %v359 = vld [vmem:[%s319 + $0x70] sm:$0xff]
        %v360 = vld [vmem:[%s319 + $0x78] sm:$0xff]
        %v361 = vpack.c.bf16 %v345, %v345
        %v362 = vpack.c.bf16 %v346, %v346
        %v363 = vpack.c.bf16 %v347, %v347
        %v364 = vpack.c.bf16 %v348, %v348
        %v365 = vpack.c.bf16 %v349, %v349
        %v366 = vpack.c.bf16 %v350, %v350
        %v367 = vpack.c.bf16 %v351, %v351
        %v368 = vpack.c.bf16 %v352, %v352
        %v369 = vpack.c.bf16 %v353, %v353
        %v370 = vpack.c.bf16 %v354, %v354
        %v371 = vpack.c.bf16 %v355, %v355
        %v372 = vpack.c.bf16 %v356, %v356
        %v373 = vpack.c.bf16 %v357, %v357
        %v374 = vpack.c.bf16 %v358, %v358
        %v375 = vpack.c.bf16 %v359, %v359
        %v376 = vpack.c.bf16 %v360, %v360
        %vm377 = vcmask 68608
        %378 = vst.msk [vmem:[#allocation2] sm:$0xf] %vm377, %v361
        %379 = vst.msk [vmem:[#allocation2 + $0x4] sm:$0xf] %vm377, %v362
        %380 = vst.msk [vmem:[#allocation2 + $0x8] sm:$0xf] %vm377, %v363
        %381 = vst.msk [vmem:[#allocation2 + $0xc] sm:$0xf] %vm377, %v364
        %382 = vst.msk [vmem:[#allocation2 + $0x10] sm:$0xf] %vm377, %v365
        %383 = vst.msk [vmem:[#allocation2 + $0x14] sm:$0xf] %vm377, %v366
        %384 = vst.msk [vmem:[#allocation2 + $0x18] sm:$0xf] %vm377, %v367
        %385 = vst.msk [vmem:[#allocation2 + $0x1c] sm:$0xf] %vm377, %v368
        %386 = vst.msk [vmem:[#allocation2 + $0x20] sm:$0xf] %vm377, %v369
        %387 = vst.msk [vmem:[#allocation2 + $0x24] sm:$0xf] %vm377, %v370
        %388 = vst.msk [vmem:[#allocation2 + $0x28] sm:$0xf] %vm377, %v371
        %389 = vst.msk [vmem:[#allocation2 + $0x2c] sm:$0xf] %vm377, %v372
        %390 = vst.msk [vmem:[#allocation2 + $0x30] sm:$0xf] %vm377, %v373
        %391 = vst.msk [vmem:[#allocation2 + $0x34] sm:$0xf] %vm377, %v374
        %392 = vst.msk [vmem:[#allocation2 + $0x38] sm:$0xf] %vm377, %v375
        %393 = vst.msk [vmem:[#allocation2 + $0x3c] sm:$0xf] %vm377, %v376
        %394 = vst [vmem:[#allocation3] sm:$0xff] 0.0
        %395 = vst [vmem:[#allocation3 + $0x8] sm:$0xff] 0.0
        %396 = vst [vmem:[#allocation3 + $0x10] sm:$0xff] 0.0
        %397 = vst [vmem:[#allocation3 + $0x18] sm:$0xff] 0.0
        %398 = vst [vmem:[#allocation3 + $0x20] sm:$0xff] 0.0
        %399 = vst [vmem:[#allocation3 + $0x28] sm:$0xff] 0.0
        %400 = vst [vmem:[#allocation3 + $0x30] sm:$0xff] 0.0
        %401 = vst [vmem:[#allocation3 + $0x38] sm:$0xff] 0.0
        %402 = vst [vmem:[#allocation3 + $0x40] sm:$0xff] 0.0
        %403 = vst [vmem:[#allocation3 + $0x48] sm:$0xff] 0.0
        %404 = vst [vmem:[#allocation3 + $0x50] sm:$0xff] 0.0
        %405 = vst [vmem:[#allocation3 + $0x58] sm:$0xff] 0.0
        %406 = vst [vmem:[#allocation3 + $0x60] sm:$0xff] 0.0
        %407 = vst [vmem:[#allocation3 + $0x68] sm:$0xff] 0.0
        %408 = vst [vmem:[#allocation3 + $0x70] sm:$0xff] 0.0
        %409 = vst [vmem:[#allocation3 + $0x78] sm:$0xff] 0.0
        %v410 = vld [vmem:[%s325] sm:$0xff]
        %v411 = vld [vmem:[%s325 + $0x8] sm:$0xff]
        %v412 = vld [vmem:[%s325 + $0x10] sm:$0xff]
        %v413 = vld [vmem:[%s325 + $0x18] sm:$0xff]
        %v414 = vld [vmem:[%s325 + $0x20] sm:$0xff]
        %v415 = vld [vmem:[%s325 + $0x28] sm:$0xff]
        %v416 = vld [vmem:[%s325 + $0x30] sm:$0xff]
        %v417 = vld [vmem:[%s325 + $0x38] sm:$0xff]
        %v418 = vld [vmem:[%s325 + $0x40] sm:$0xff]
        %v419 = vld [vmem:[%s325 + $0x48] sm:$0xff]
        %v420 = vld [vmem:[%s325 + $0x50] sm:$0xff]
        %v421 = vld [vmem:[%s325 + $0x58] sm:$0xff]
        %v422 = vld [vmem:[%s325 + $0x60] sm:$0xff]
        %v423 = vld [vmem:[%s325 + $0x68] sm:$0xff]
        %v424 = vld [vmem:[%s325 + $0x70] sm:$0xff]
        %v425 = vld [vmem:[%s325 + $0x78] sm:$0xff]
        %vm426 = vcmask 80896
        %427 = vst.msk [vmem:[#allocation3] sm:$0xff] %vm426, %v410
        %428 = vst.msk [vmem:[#allocation3 + $0x8] sm:$0xff] %vm426, %v411
        %429 = vst.msk [vmem:[#allocation3 + $0x10] sm:$0xff] %vm426, %v412
        %430 = vst.msk [vmem:[#allocation3 + $0x18] sm:$0xff] %vm426, %v413
        %431 = vst.msk [vmem:[#allocation3 + $0x20] sm:$0xff] %vm426, %v414
        %432 = vst.msk [vmem:[#allocation3 + $0x28] sm:$0xff] %vm426, %v415
        %433 = vst.msk [vmem:[#allocation3 + $0x30] sm:$0xff] %vm426, %v416
        %434 = vst.msk [vmem:[#allocation3 + $0x38] sm:$0xff] %vm426, %v417
        %435 = vst.msk [vmem:[#allocation3 + $0x40] sm:$0xff] %vm426, %v418
        %436 = vst.msk [vmem:[#allocation3 + $0x48] sm:$0xff] %vm426, %v419
        %437 = vst.msk [vmem:[#allocation3 + $0x50] sm:$0xff] %vm426, %v420
        %438 = vst.msk [vmem:[#allocation3 + $0x58] sm:$0xff] %vm426, %v421
        %439 = vst.msk [vmem:[#allocation3 + $0x60] sm:$0xff] %vm426, %v422
        %440 = vst.msk [vmem:[#allocation3 + $0x68] sm:$0xff] %vm426, %v423
        %441 = vst.msk [vmem:[#allocation3 + $0x70] sm:$0xff] %vm426, %v424
        %442 = vst.msk [vmem:[#allocation3 + $0x78] sm:$0xff] %vm426, %v425
        %v443 = vld [vmem:[#allocation2] sm:$0xf]
        %v444 = vld [vmem:[#allocation2 + $0x4] sm:$0xf]
        %v445 = vld [vmem:[#allocation2 + $0x8] sm:$0xf]
        %v446 = vld [vmem:[#allocation2 + $0xc] sm:$0xf]
        %v447 = vld [vmem:[#allocation2 + $0x10] sm:$0xf]
        %v448 = vld [vmem:[#allocation2 + $0x14] sm:$0xf]
        %v449 = vld [vmem:[#allocation2 + $0x18] sm:$0xf]
        %v450 = vld [vmem:[#allocation2 + $0x1c] sm:$0xf]
        %v451 = vld [vmem:[#allocation2 + $0x20] sm:$0xf]
        %v452 = vld [vmem:[#allocation2 + $0x24] sm:$0xf]
        %v453 = vld [vmem:[#allocation2 + $0x28] sm:$0xf]
        %v454 = vld [vmem:[#allocation2 + $0x2c] sm:$0xf]
        %v455 = vld [vmem:[#allocation2 + $0x30] sm:$0xf]
        %v456 = vld [vmem:[#allocation2 + $0x34] sm:$0xf]
        %v457 = vld [vmem:[#allocation2 + $0x38] sm:$0xf]
        %v458 = vld [vmem:[#allocation2 + $0x3c] sm:$0xf]
        %v459 = vld [vmem:[%s2] sm:$0xff]
        %v460 = vld [vmem:[%s2 + $0x8] sm:$0xff]
        %v461 = vld [vmem:[%s3] sm:$0x3]
        %v463 = vperm.slane %v461, 0
        %v464 = vperm.slane %v461, 1
        %v483 = vunpack.c.l.b16 %v443
        %v484 = vunpack.c.l.b16 %v444
        %v485 = vunpack.c.l.b16 %v445
        %v486 = vunpack.c.l.b16 %v446
        %v487 = vunpack.c.l.b16 %v447
        %v488 = vunpack.c.l.b16 %v448
        %v489 = vunpack.c.l.b16 %v449
        %v490 = vunpack.c.l.b16 %v450
        %v491 = vunpack.c.l.b16 %v451
        %v492 = vunpack.c.l.b16 %v452
        %v493 = vunpack.c.l.b16 %v453
        %v494 = vunpack.c.l.b16 %v454
        %v495 = vunpack.c.l.b16 %v455
        %v496 = vunpack.c.l.b16 %v456
        %v497 = vunpack.c.l.b16 %v457
        %v498 = vunpack.c.l.b16 %v458
        %v499 = vpack.c.b16 %v484, %v483
        %v500 = vpack.c.b16 %v486, %v485
        %v501 = vpack.c.b16 %v488, %v487
        %v502 = vpack.c.b16 %v490, %v489
        %v503 = vpack.c.b16 %v492, %v491
        %v504 = vpack.c.b16 %v494, %v493
        %v505 = vpack.c.b16 %v496, %v495
        %v506 = vpack.c.b16 %v498, %v497
        %v509 = vunpack.c.l.b16 %v459
        %v510 = vunpack.c.h.b16 %v459
        %v511 = vunpack.c.l.b16 %v460
        %v512 = vunpack.c.h.b16 %v460
        %v513 = vpack.c.b16 %v511, %v509
        %v514 = vpack.c.b16 %v512, %v510
        %vm517 = vcmask 130048
        %v519 = vsel %vm517, %v499, 0
        %v522 = vsel %vm517, %v500, 0
        %v525 = vsel %vm517, %v501, 0
        %v528 = vsel %vm517, %v502, 0
        %v531 = vsel %vm517, %v503, 0
        %v534 = vsel %vm517, %v504, 0
        %v537 = vsel %vm517, %v505, 0
        %v540 = vsel %vm517, %v506, 0
        %542 = vmatpush.bf16.msra.mxu0 0
        %543 = vmatpush.bf16.msra.mxu0 0
        %544 = vmatpush.bf16.msra.mxu0 0
        %545 = vmatpush.bf16.msra.mxu0 0
        %546 = vmatpush.bf16.msra.mxu0 0
        %547 = vmatpush.bf16.msra.mxu0 0
        %548 = vmatpush.bf16.msra.mxu0 0
        %549 = vmatpush.bf16.msra.mxu0 %v513
        %550 = vmatmul.bf16.gmra.mxu0 %v519
        %v551 = vpop.f32.mrf.mxu0
        %v552 = vadd.f32 %v463, %v551
        %v553 = vpop.f32.mrf.mxu0
        %v554 = vadd.f32 %v463, %v553
        %555 = vmatmul.bf16.gmra.mxu0 %v522
        %v556 = vpop.f32.mrf.mxu0
        %v557 = vadd.f32 %v463, %v556
        %v558 = vpop.f32.mrf.mxu0
        %v559 = vadd.f32 %v463, %v558
        %560 = vmatmul.bf16.gmra.mxu0 %v525
        %v561 = vpop.f32.mrf.mxu0
        %v562 = vadd.f32 %v463, %v561
        %v563 = vpop.f32.mrf.mxu0
        %v564 = vadd.f32 %v463, %v563
        %565 = vmatmul.bf16.gmra.mxu0 %v528
        %v566 = vpop.f32.mrf.mxu0
        %v567 = vadd.f32 %v463, %v566
        %v568 = vpop.f32.mrf.mxu0
        %v569 = vadd.f32 %v463, %v568
        %570 = vmatmul.bf16.gmra.mxu0 %v531
        %v571 = vpop.f32.mrf.mxu0
        %v572 = vadd.f32 %v463, %v571
        %v573 = vpop.f32.mrf.mxu0
        %v574 = vadd.f32 %v463, %v573
        %575 = vmatmul.bf16.gmra.mxu0 %v534
        %v576 = vpop.f32.mrf.mxu0
        %v577 = vadd.f32 %v463, %v576
        %v578 = vpop.f32.mrf.mxu0
        %v579 = vadd.f32 %v463, %v578
        %580 = vmatmul.bf16.gmra.mxu0 %v537
        %v581 = vpop.f32.mrf.mxu0
        %v582 = vadd.f32 %v463, %v581
        %v583 = vpop.f32.mrf.mxu0
        %v584 = vadd.f32 %v463, %v583
        %585 = vmatmul.bf16.gmra.mxu0 %v540
        %v586 = vpop.f32.mrf.mxu0
        %v587 = vadd.f32 %v463, %v586
        %v588 = vpop.f32.mrf.mxu0
        %v589 = vadd.f32 %v463, %v588
        %590 = vdwg.mxu0
        %591 = vmatpush.bf16.msra.mxu0 0
        %592 = vmatpush.bf16.msra.mxu0 0
        %593 = vmatpush.bf16.msra.mxu0 0
        %594 = vmatpush.bf16.msra.mxu0 0
        %595 = vmatpush.bf16.msra.mxu0 0
        %596 = vmatpush.bf16.msra.mxu0 0
        %597 = vmatpush.bf16.msra.mxu0 0
        %598 = vmatpush.bf16.msra.mxu0 %v514
        %599 = vmatmul.bf16.gmra.mxu0 %v519
        %v600 = vpop.f32.mrf.mxu0
        %v601 = vadd.f32 %v464, %v600
        %v602 = vpop.f32.mrf.mxu0
        %v603 = vadd.f32 %v464, %v602
        %604 = vmatmul.bf16.gmra.mxu0 %v522
        %v605 = vpop.f32.mrf.mxu0
        %v606 = vadd.f32 %v464, %v605
        %v607 = vpop.f32.mrf.mxu0
        %v608 = vadd.f32 %v464, %v607
        %609 = vmatmul.bf16.gmra.mxu0 %v525
        %v610 = vpop.f32.mrf.mxu0
        %v611 = vadd.f32 %v464, %v610
        %v612 = vpop.f32.mrf.mxu0
        %v613 = vadd.f32 %v464, %v612
        %614 = vmatmul.bf16.gmra.mxu0 %v528
        %v615 = vpop.f32.mrf.mxu0
        %v616 = vadd.f32 %v464, %v615
        %v617 = vpop.f32.mrf.mxu0
        %v618 = vadd.f32 %v464, %v617
        %619 = vmatmul.bf16.gmra.mxu0 %v531
        %v620 = vpop.f32.mrf.mxu0
        %v621 = vadd.f32 %v464, %v620
        %v622 = vpop.f32.mrf.mxu0
        %v623 = vadd.f32 %v464, %v622
        %624 = vmatmul.bf16.gmra.mxu0 %v534
        %v625 = vpop.f32.mrf.mxu0
        %v626 = vadd.f32 %v464, %v625
        %v627 = vpop.f32.mrf.mxu0
        %v628 = vadd.f32 %v464, %v627
        %629 = vmatmul.bf16.gmra.mxu0 %v537
        %v630 = vpop.f32.mrf.mxu0
        %v631 = vadd.f32 %v464, %v630
        %v632 = vpop.f32.mrf.mxu0
        %v633 = vadd.f32 %v464, %v632
        %634 = vmatmul.bf16.gmra.mxu0 %v540
        %v635 = vpop.f32.mrf.mxu0
        %v636 = vadd.f32 %v464, %v635
        %v637 = vpop.f32.mrf.mxu0
        %v638 = vadd.f32 %v464, %v637
        %639 = vdwg.mxu0
        %v640 = vmax.f32 %v552, 0.0
        %v641 = vmax.f32 %v601, 0.0
        %v642 = vmax.f32 %v554, 0.0
        %v643 = vmax.f32 %v603, 0.0
        %v644 = vmax.f32 %v557, 0.0
        %v645 = vmax.f32 %v606, 0.0
        %v646 = vmax.f32 %v559, 0.0
        %v647 = vmax.f32 %v608, 0.0
        %v648 = vmax.f32 %v562, 0.0
        %v649 = vmax.f32 %v611, 0.0
        %v650 = vmax.f32 %v564, 0.0
        %v651 = vmax.f32 %v613, 0.0
        %v652 = vmax.f32 %v567, 0.0
        %v653 = vmax.f32 %v616, 0.0
        %v654 = vmax.f32 %v569, 0.0
        %v655 = vmax.f32 %v618, 0.0
        %v656 = vmax.f32 %v572, 0.0
        %v657 = vmax.f32 %v621, 0.0
        %v658 = vmax.f32 %v574, 0.0
        %v659 = vmax.f32 %v623, 0.0
        %v660 = vmax.f32 %v577, 0.0
        %v661 = vmax.f32 %v626, 0.0
        %v662 = vmax.f32 %v579, 0.0
        %v663 = vmax.f32 %v628, 0.0
        %v664 = vmax.f32 %v582, 0.0
        %v665 = vmax.f32 %v631, 0.0
        %v666 = vmax.f32 %v584, 0.0
        %v667 = vmax.f32 %v633, 0.0
        %v668 = vmax.f32 %v587, 0.0
        %v669 = vmax.f32 %v636, 0.0
        %v670 = vmax.f32 %v589, 0.0
        %v671 = vmax.f32 %v638, 0.0
        %v672 = vpack.c.bf16 %v642, %v640
        %v673 = vpack.c.bf16 %v643, %v641
        %v674 = vpack.c.bf16 %v646, %v644
        %v675 = vpack.c.bf16 %v647, %v645
        %v676 = vpack.c.bf16 %v650, %v648
        %v677 = vpack.c.bf16 %v651, %v649
        %v678 = vpack.c.bf16 %v654, %v652
        %v679 = vpack.c.bf16 %v655, %v653
        %v680 = vpack.c.bf16 %v658, %v656
        %v681 = vpack.c.bf16 %v659, %v657
        %v682 = vpack.c.bf16 %v662, %v660
        %v683 = vpack.c.bf16 %v663, %v661
        %v684 = vpack.c.bf16 %v666, %v664
        %v685 = vpack.c.bf16 %v667, %v665
        %v686 = vpack.c.bf16 %v670, %v668
        %v687 = vpack.c.bf16 %v671, %v669
        %v688 = vld [vmem:[%s4] sm:$0xff]
        %v689 = vld [vmem:[%s4 + $0x8] sm:$0xff]
        %v690 = vld [vmem:[%s4 + $0x10] sm:$0xff]
        %v691 = vld [vmem:[%s4 + $0x18] sm:$0xff]
        %v692 = vld [vmem:[%s4 + $0x20] sm:$0xff]
        %v693 = vld [vmem:[%s4 + $0x28] sm:$0xff]
        %v694 = vld [vmem:[%s4 + $0x30] sm:$0xff]
        %v695 = vld [vmem:[%s4 + $0x38] sm:$0xff]
        %v696 = vld [vmem:[%s4 + $0x40] sm:$0xff]
        %v697 = vld [vmem:[%s4 + $0x48] sm:$0xff]
        %v698 = vld [vmem:[%s4 + $0x50] sm:$0xff]
        %v699 = vld [vmem:[%s4 + $0x58] sm:$0xff]
        %v700 = vld [vmem:[%s4 + $0x60] sm:$0xff]
        %v701 = vld [vmem:[%s4 + $0x68] sm:$0xff]
        %v702 = vld [vmem:[%s4 + $0x70] sm:$0xff]
        %v703 = vld [vmem:[%s4 + $0x78] sm:$0xff]
        %v704 = vld [vmem:[%s4 + $0x80] sm:$0xff]
        %v705 = vld [vmem:[%s4 + $0x88] sm:$0xff]
        %v706 = vld [vmem:[%s4 + $0x90] sm:$0xff]
        %v707 = vld [vmem:[%s4 + $0x98] sm:$0xff]
        %v708 = vld [vmem:[%s4 + $0xa0] sm:$0xff]
        %v709 = vld [vmem:[%s4 + $0xa8] sm:$0xff]
        %v710 = vld [vmem:[%s4 + $0xb0] sm:$0xff]
        %v711 = vld [vmem:[%s4 + $0xb8] sm:$0xff]
        %v712 = vld [vmem:[%s4 + $0xc0] sm:$0xff]
        %v713 = vld [vmem:[%s4 + $0xc8] sm:$0xff]
        %v714 = vld [vmem:[%s4 + $0xd0] sm:$0xff]
        %v715 = vld [vmem:[%s4 + $0xd8] sm:$0xff]
        %v716 = vld [vmem:[%s4 + $0xe0] sm:$0xff]
        %v717 = vld [vmem:[%s4 + $0xe8] sm:$0xff]
        %v718 = vld [vmem:[%s4 + $0xf0] sm:$0xff]
        %v719 = vld [vmem:[%s4 + $0xf8] sm:$0xff]
        %v720 = vld [vmem:[%s5] sm:$0x3]
        %v722 = vperm.slane %v720, 0
        %v723 = vperm.slane %v720, 1
        %v758 = vunpack.c.l.b16 %v688
        %v759 = vunpack.c.h.b16 %v688
        %v760 = vunpack.c.l.b16 %v689
        %v761 = vunpack.c.h.b16 %v689
        %v762 = vunpack.c.l.b16 %v690
        %v763 = vunpack.c.h.b16 %v690
        %v764 = vunpack.c.l.b16 %v691
        %v765 = vunpack.c.h.b16 %v691
        %v766 = vunpack.c.l.b16 %v692
        %v767 = vunpack.c.h.b16 %v692
        %v768 = vunpack.c.l.b16 %v693
        %v769 = vunpack.c.h.b16 %v693
        %v770 = vunpack.c.l.b16 %v694
        %v771 = vunpack.c.h.b16 %v694
        %v772 = vunpack.c.l.b16 %v695
        %v773 = vunpack.c.h.b16 %v695
        %v774 = vunpack.c.l.b16 %v696
        %v775 = vunpack.c.h.b16 %v696
        %v776 = vunpack.c.l.b16 %v697
        %v777 = vunpack.c.h.b16 %v697
        %v778 = vunpack.c.l.b16 %v698
        %v779 = vunpack.c.h.b16 %v698
        %v780 = vunpack.c.l.b16 %v699
        %v781 = vunpack.c.h.b16 %v699
        %v782 = vunpack.c.l.b16 %v700
        %v783 = vunpack.c.h.b16 %v700
        %v784 = vunpack.c.l.b16 %v701
        %v785 = vunpack.c.h.b16 %v701
        %v786 = vunpack.c.l.b16 %v702
        %v787 = vunpack.c.h.b16 %v702
        %v788 = vunpack.c.l.b16 %v703
        %v789 = vunpack.c.h.b16 %v703
        %v790 = vunpack.c.l.b16 %v704
        %v791 = vunpack.c.h.b16 %v704
        %v792 = vunpack.c.l.b16 %v705
        %v793 = vunpack.c.h.b16 %v705
        %v794 = vunpack.c.l.b16 %v706
        %v795 = vunpack.c.h.b16 %v706
        %v796 = vunpack.c.l.b16 %v707
        %v797 = vunpack.c.h.b16 %v707
        %v798 = vunpack.c.l.b16 %v708
        %v799 = vunpack.c.h.b16 %v708
        %v800 = vunpack.c.l.b16 %v709
        %v801 = vunpack.c.h.b16 %v709
        %v802 = vunpack.c.l.b16 %v710
        %v803 = vunpack.c.h.b16 %v710
        %v804 = vunpack.c.l.b16 %v711
        %v805 = vunpack.c.h.b16 %v711
        %v806 = vunpack.c.l.b16 %v712
        %v807 = vunpack.c.h.b16 %v712
        %v808 = vunpack.c.l.b16 %v713
        %v809 = vunpack.c.h.b16 %v713
        %v810 = vunpack.c.l.b16 %v714
        %v811 = vunpack.c.h.b16 %v714
        %v812 = vunpack.c.l.b16 %v715
        %v813 = vunpack.c.h.b16 %v715
        %v814 = vunpack.c.l.b16 %v716
        %v815 = vunpack.c.h.b16 %v716
        %v816 = vunpack.c.l.b16 %v717
        %v817 = vunpack.c.h.b16 %v717
        %v818 = vunpack.c.l.b16 %v718
        %v819 = vunpack.c.h.b16 %v718
        %v820 = vunpack.c.l.b16 %v719
        %v821 = vunpack.c.h.b16 %v719
        %v822 = vpack.c.b16 %v760, %v758
        %v823 = vpack.c.b16 %v761, %v759
        %v824 = vpack.c.b16 %v764, %v762
        %v825 = vpack.c.b16 %v765, %v763
        %v826 = vpack.c.b16 %v768, %v766
        %v827 = vpack.c.b16 %v769, %v767
        %v828 = vpack.c.b16 %v772, %v770
        %v829 = vpack.c.b16 %v773, %v771
        %v830 = vpack.c.b16 %v776, %v774
        %v831 = vpack.c.b16 %v777, %v775
        %v832 = vpack.c.b16 %v780, %v778
        %v833 = vpack.c.b16 %v781, %v779
        %v834 = vpack.c.b16 %v784, %v782
        %v835 = vpack.c.b16 %v785, %v783
        %v836 = vpack.c.b16 %v788, %v786
        %v837 = vpack.c.b16 %v789, %v787
        %v838 = vpack.c.b16 %v792, %v790
        %v839 = vpack.c.b16 %v793, %v791
        %v840 = vpack.c.b16 %v796, %v794
        %v841 = vpack.c.b16 %v797, %v795
        %v842 = vpack.c.b16 %v800, %v798
        %v843 = vpack.c.b16 %v801, %v799
        %v844 = vpack.c.b16 %v804, %v802
        %v845 = vpack.c.b16 %v805, %v803
        %v846 = vpack.c.b16 %v808, %v806
        %v847 = vpack.c.b16 %v809, %v807
        %v848 = vpack.c.b16 %v812, %v810
        %v849 = vpack.c.b16 %v813, %v811
        %v850 = vpack.c.b16 %v816, %v814
        %v851 = vpack.c.b16 %v817, %v815
        %v852 = vpack.c.b16 %v820, %v818
        %v853 = vpack.c.b16 %v821, %v819
        %886 = vmatpush.bf16.msra.mxu0 %v836
        %887 = vmatpush.bf16.msra.mxu0 %v834
        %888 = vmatpush.bf16.msra.mxu0 %v832
        %889 = vmatpush.bf16.msra.mxu0 %v830
        %890 = vmatpush.bf16.msra.mxu0 %v828
        %891 = vmatpush.bf16.msra.mxu0 %v826
        %892 = vmatpush.bf16.msra.mxu0 %v824
        %893 = vmatpush.bf16.msra.mxu0 %v822
        %894 = vmatmul.bf16.gmra.mxu0 %v672
        %v895 = vpop.f32.mrf.mxu0
        %v896 = vadd.f32 %v722, %v895
        %v897 = vpop.f32.mrf.mxu0
        %v898 = vadd.f32 %v722, %v897
        %899 = vmatmul.bf16.gmra.mxu0 %v674
        %v900 = vpop.f32.mrf.mxu0
        %v901 = vadd.f32 %v722, %v900
        %v902 = vpop.f32.mrf.mxu0
        %v903 = vadd.f32 %v722, %v902
        %904 = vmatmul.bf16.gmra.mxu0 %v676
        %v905 = vpop.f32.mrf.mxu0
        %v906 = vadd.f32 %v722, %v905
        %v907 = vpop.f32.mrf.mxu0
        %v908 = vadd.f32 %v722, %v907
        %909 = vmatmul.bf16.gmra.mxu0 %v678
        %v910 = vpop.f32.mrf.mxu0
        %v911 = vadd.f32 %v722, %v910
        %v912 = vpop.f32.mrf.mxu0
        %v913 = vadd.f32 %v722, %v912
        %914 = vmatmul.bf16.gmra.mxu0 %v680
        %v915 = vpop.f32.mrf.mxu0
        %v916 = vadd.f32 %v722, %v915
        %v917 = vpop.f32.mrf.mxu0
        %v918 = vadd.f32 %v722, %v917
        %919 = vmatmul.bf16.gmra.mxu0 %v682
        %v920 = vpop.f32.mrf.mxu0
        %v921 = vadd.f32 %v722, %v920
        %v922 = vpop.f32.mrf.mxu0
        %v923 = vadd.f32 %v722, %v922
        %924 = vmatmul.bf16.gmra.mxu0 %v684
        %v925 = vpop.f32.mrf.mxu0
        %v926 = vadd.f32 %v722, %v925
        %v927 = vpop.f32.mrf.mxu0
        %v928 = vadd.f32 %v722, %v927
        %929 = vmatmul.bf16.gmra.mxu0 %v686
        %v930 = vpop.f32.mrf.mxu0
        %v931 = vadd.f32 %v722, %v930
        %v932 = vpop.f32.mrf.mxu0
        %v933 = vadd.f32 %v722, %v932
        %934 = vdwg.mxu0
        %935 = vmatpush.bf16.msra.mxu0 %v852
        %936 = vmatpush.bf16.msra.mxu0 %v850
        %937 = vmatpush.bf16.msra.mxu0 %v848
        %938 = vmatpush.bf16.msra.mxu0 %v846
        %939 = vmatpush.bf16.msra.mxu0 %v844
        %940 = vmatpush.bf16.msra.mxu0 %v842
        %941 = vmatpush.bf16.msra.mxu0 %v840
        %942 = vmatpush.bf16.msra.mxu0 %v838
        %943 = vmatmul.bf16.gmra.mxu0 %v673
        %v944 = vpop.f32.mrf.mxu0
        %v945 = vadd.f32 %v896, %v944
        %v946 = vpop.f32.mrf.mxu0
        %v947 = vadd.f32 %v898, %v946
        %948 = vmatmul.bf16.gmra.mxu0 %v675
        %v949 = vpop.f32.mrf.mxu0
        %v950 = vadd.f32 %v901, %v949
        %v951 = vpop.f32.mrf.mxu0
        %v952 = vadd.f32 %v903, %v951
        %953 = vmatmul.bf16.gmra.mxu0 %v677
        %v954 = vpop.f32.mrf.mxu0
        %v955 = vadd.f32 %v906, %v954
        %v956 = vpop.f32.mrf.mxu0
        %v957 = vadd.f32 %v908, %v956
        %958 = vmatmul.bf16.gmra.mxu0 %v679
        %v959 = vpop.f32.mrf.mxu0
        %v960 = vadd.f32 %v911, %v959
        %v961 = vpop.f32.mrf.mxu0
        %v962 = vadd.f32 %v913, %v961
        %963 = vmatmul.bf16.gmra.mxu0 %v681
        %v964 = vpop.f32.mrf.mxu0
        %v965 = vadd.f32 %v916, %v964
        %v966 = vpop.f32.mrf.mxu0
        %v967 = vadd.f32 %v918, %v966
        %968 = vmatmul.bf16.gmra.mxu0 %v683
        %v969 = vpop.f32.mrf.mxu0
        %v970 = vadd.f32 %v921, %v969
        %v971 = vpop.f32.mrf.mxu0
        %v972 = vadd.f32 %v923, %v971
        %973 = vmatmul.bf16.gmra.mxu0 %v685
        %v974 = vpop.f32.mrf.mxu0
        %v975 = vadd.f32 %v926, %v974
        %v976 = vpop.f32.mrf.mxu0
        %v977 = vadd.f32 %v928, %v976
        %978 = vmatmul.bf16.gmra.mxu0 %v687
        %v979 = vpop.f32.mrf.mxu0
        %v980 = vadd.f32 %v931, %v979
        %v981 = vpop.f32.mrf.mxu0
        %v982 = vadd.f32 %v933, %v981
        %983 = vdwg.mxu0
        %984 = vmatpush.bf16.msra.mxu0 %v837
        %985 = vmatpush.bf16.msra.mxu0 %v835
        %986 = vmatpush.bf16.msra.mxu0 %v833
        %987 = vmatpush.bf16.msra.mxu0 %v831
        %988 = vmatpush.bf16.msra.mxu0 %v829
        %989 = vmatpush.bf16.msra.mxu0 %v827
        %990 = vmatpush.bf16.msra.mxu0 %v825
        %991 = vmatpush.bf16.msra.mxu0 %v823
        %992 = vmatmul.bf16.gmra.mxu0 %v672
        %v993 = vpop.f32.mrf.mxu0
        %v994 = vadd.f32 %v723, %v993
        %v995 = vpop.f32.mrf.mxu0
        %v996 = vadd.f32 %v723, %v995
        %997 = vmatmul.bf16.gmra.mxu0 %v674
        %v998 = vpop.f32.mrf.mxu0
        %v999 = vadd.f32 %v723, %v998
        %v1000 = vpop.f32.mrf.mxu0
        %v1001 = vadd.f32 %v723, %v1000
        %1002 = vmatmul.bf16.gmra.mxu0 %v676
        %v1003 = vpop.f32.mrf.mxu0
        %v1004 = vadd.f32 %v723, %v1003
        %v1005 = vpop.f32.mrf.mxu0
        %v1006 = vadd.f32 %v723, %v1005
        %1007 = vmatmul.bf16.gmra.mxu0 %v678
        %v1008 = vpop.f32.mrf.mxu0
        %v1009 = vadd.f32 %v723, %v1008
        %v1010 = vpop.f32.mrf.mxu0
        %v1011 = vadd.f32 %v723, %v1010
        %1012 = vmatmul.bf16.gmra.mxu0 %v680
        %v1013 = vpop.f32.mrf.mxu0
        %v1014 = vadd.f32 %v723, %v1013
        %v1015 = vpop.f32.mrf.mxu0
        %v1016 = vadd.f32 %v723, %v1015
        %1017 = vmatmul.bf16.gmra.mxu0 %v682
        %v1018 = vpop.f32.mrf.mxu0
        %v1019 = vadd.f32 %v723, %v1018
        %v1020 = vpop.f32.mrf.mxu0
        %v1021 = vadd.f32 %v723, %v1020
        %1022 = vmatmul.bf16.gmra.mxu0 %v684
        %v1023 = vpop.f32.mrf.mxu0
        %v1024 = vadd.f32 %v723, %v1023
        %v1025 = vpop.f32.mrf.mxu0
        %v1026 = vadd.f32 %v723, %v1025
        %1027 = vmatmul.bf16.gmra.mxu0 %v686
        %v1028 = vpop.f32.mrf.mxu0
        %v1029 = vadd.f32 %v723, %v1028
        %v1030 = vpop.f32.mrf.mxu0
        %v1031 = vadd.f32 %v723, %v1030
        %1032 = vdwg.mxu0
        %1033 = vmatpush.bf16.msra.mxu0 %v853
        %1034 = vmatpush.bf16.msra.mxu0 %v851
        %1035 = vmatpush.bf16.msra.mxu0 %v849
        %1036 = vmatpush.bf16.msra.mxu0 %v847
        %1037 = vmatpush.bf16.msra.mxu0 %v845
        %1038 = vmatpush.bf16.msra.mxu0 %v843
        %1039 = vmatpush.bf16.msra.mxu0 %v841
        %1040 = vmatpush.bf16.msra.mxu0 %v839
        %1041 = vmatmul.bf16.gmra.mxu0 %v673
        %v1042 = vpop.f32.mrf.mxu0
        %v1043 = vadd.f32 %v994, %v1042
        %v1044 = vpop.f32.mrf.mxu0
        %v1045 = vadd.f32 %v996, %v1044
        %1046 = vmatmul.bf16.gmra.mxu0 %v675
        %v1047 = vpop.f32.mrf.mxu0
        %v1048 = vadd.f32 %v999, %v1047
        %v1049 = vpop.f32.mrf.mxu0
        %v1050 = vadd.f32 %v1001, %v1049
        %1051 = vmatmul.bf16.gmra.mxu0 %v677
        %v1052 = vpop.f32.mrf.mxu0
        %v1053 = vadd.f32 %v1004, %v1052
        %v1054 = vpop.f32.mrf.mxu0
        %v1055 = vadd.f32 %v1006, %v1054
        %1056 = vmatmul.bf16.gmra.mxu0 %v679
        %v1057 = vpop.f32.mrf.mxu0
        %v1058 = vadd.f32 %v1009, %v1057
        %v1059 = vpop.f32.mrf.mxu0
        %v1060 = vadd.f32 %v1011, %v1059
        %1061 = vmatmul.bf16.gmra.mxu0 %v681
        %v1062 = vpop.f32.mrf.mxu0
        %v1063 = vadd.f32 %v1014, %v1062
        %v1064 = vpop.f32.mrf.mxu0
        %v1065 = vadd.f32 %v1016, %v1064
        %1066 = vmatmul.bf16.gmra.mxu0 %v683
        %v1067 = vpop.f32.mrf.mxu0
        %v1068 = vadd.f32 %v1019, %v1067
        %v1069 = vpop.f32.mrf.mxu0
        %v1070 = vadd.f32 %v1021, %v1069
        %1071 = vmatmul.bf16.gmra.mxu0 %v685
        %v1072 = vpop.f32.mrf.mxu0
        %v1073 = vadd.f32 %v1024, %v1072
        %v1074 = vpop.f32.mrf.mxu0
        %v1075 = vadd.f32 %v1026, %v1074
        %1076 = vmatmul.bf16.gmra.mxu0 %v687
        %v1077 = vpop.f32.mrf.mxu0
        %v1078 = vadd.f32 %v1029, %v1077
        %v1079 = vpop.f32.mrf.mxu0
        %v1080 = vadd.f32 %v1031, %v1079
        %1081 = vdwg.mxu0
        %v1082 = vmax.f32 %v945, 0.0
        %v1083 = vmax.f32 %v1043, 0.0
        %v1084 = vmax.f32 %v947, 0.0
        %v1085 = vmax.f32 %v1045, 0.0
        %v1086 = vmax.f32 %v950, 0.0
        %v1087 = vmax.f32 %v1048, 0.0
        %v1088 = vmax.f32 %v952, 0.0
        %v1089 = vmax.f32 %v1050, 0.0
        %v1090 = vmax.f32 %v955, 0.0
        %v1091 = vmax.f32 %v1053, 0.0
        %v1092 = vmax.f32 %v957, 0.0
        %v1093 = vmax.f32 %v1055, 0.0
        %v1094 = vmax.f32 %v960, 0.0
        %v1095 = vmax.f32 %v1058, 0.0
        %v1096 = vmax.f32 %v962, 0.0
        %v1097 = vmax.f32 %v1060, 0.0
        %v1098 = vmax.f32 %v965, 0.0
        %v1099 = vmax.f32 %v1063, 0.0
        %v1100 = vmax.f32 %v967, 0.0
        %v1101 = vmax.f32 %v1065, 0.0
        %v1102 = vmax.f32 %v970, 0.0
        %v1103 = vmax.f32 %v1068, 0.0
        %v1104 = vmax.f32 %v972, 0.0
        %v1105 = vmax.f32 %v1070, 0.0
        %v1106 = vmax.f32 %v975, 0.0
        %v1107 = vmax.f32 %v1073, 0.0
        %v1108 = vmax.f32 %v977, 0.0
        %v1109 = vmax.f32 %v1075, 0.0
        %v1110 = vmax.f32 %v980, 0.0
        %v1111 = vmax.f32 %v1078, 0.0
        %v1112 = vmax.f32 %v982, 0.0
        %v1113 = vmax.f32 %v1080, 0.0
        %v1114 = vpack.c.bf16 %v1084, %v1082
        %v1115 = vpack.c.bf16 %v1085, %v1083
        %v1116 = vpack.c.bf16 %v1088, %v1086
        %v1117 = vpack.c.bf16 %v1089, %v1087
        %v1118 = vpack.c.bf16 %v1092, %v1090
        %v1119 = vpack.c.bf16 %v1093, %v1091
        %v1120 = vpack.c.bf16 %v1096, %v1094
        %v1121 = vpack.c.bf16 %v1097, %v1095
        %v1122 = vpack.c.bf16 %v1100, %v1098
        %v1123 = vpack.c.bf16 %v1101, %v1099
        %v1124 = vpack.c.bf16 %v1104, %v1102
        %v1125 = vpack.c.bf16 %v1105, %v1103
        %v1126 = vpack.c.bf16 %v1108, %v1106
        %v1127 = vpack.c.bf16 %v1109, %v1107
        %v1128 = vpack.c.bf16 %v1112, %v1110
        %v1129 = vpack.c.bf16 %v1113, %v1111
        %v1130 = vld [vmem:[%s6] sm:$0xf]
        %v1131 = vld [vmem:[%s6 + $0x4] sm:$0xf]
        %v1132 = vld [vmem:[%s6 + $0x8] sm:$0xf]
        %v1133 = vld [vmem:[%s6 + $0xc] sm:$0xf]
        %v1134 = vld [vmem:[%s6 + $0x10] sm:$0xf]
        %v1135 = vld [vmem:[%s6 + $0x14] sm:$0xf]
        %v1136 = vld [vmem:[%s6 + $0x18] sm:$0xf]
        %v1137 = vld [vmem:[%s6 + $0x1c] sm:$0xf]
        %v1138 = vld [vmem:[%s6 + $0x20] sm:$0xf]
        %v1139 = vld [vmem:[%s6 + $0x24] sm:$0xf]
        %v1140 = vld [vmem:[%s6 + $0x28] sm:$0xf]
        %v1141 = vld [vmem:[%s6 + $0x2c] sm:$0xf]
        %v1142 = vld [vmem:[%s6 + $0x30] sm:$0xf]
        %v1143 = vld [vmem:[%s6 + $0x34] sm:$0xf]
        %v1144 = vld [vmem:[%s6 + $0x38] sm:$0xf]
        %v1145 = vld [vmem:[%s6 + $0x3c] sm:$0xf]
        %v1146 = vld [vmem:[%s6 + $0x40] sm:$0xf]
        %v1147 = vld [vmem:[%s6 + $0x44] sm:$0xf]
        %v1148 = vld [vmem:[%s6 + $0x48] sm:$0xf]
        %v1149 = vld [vmem:[%s6 + $0x4c] sm:$0xf]
        %v1150 = vld [vmem:[%s6 + $0x50] sm:$0xf]
        %v1151 = vld [vmem:[%s6 + $0x54] sm:$0xf]
        %v1152 = vld [vmem:[%s6 + $0x58] sm:$0xf]
        %v1153 = vld [vmem:[%s6 + $0x5c] sm:$0xf]
        %v1154 = vld [vmem:[%s6 + $0x60] sm:$0xf]
        %v1155 = vld [vmem:[%s6 + $0x64] sm:$0xf]
        %v1156 = vld [vmem:[%s6 + $0x68] sm:$0xf]
        %v1157 = vld [vmem:[%s6 + $0x6c] sm:$0xf]
        %v1158 = vld [vmem:[%s6 + $0x70] sm:$0xf]
        %v1159 = vld [vmem:[%s6 + $0x74] sm:$0xf]
        %v1160 = vld [vmem:[%s6 + $0x78] sm:$0xf]
        %v1161 = vld [vmem:[%s6 + $0x7c] sm:$0xf]
        %v1162 = vld [vmem:[%s7] sm:$0x1]
        %v1164 = vperm.slane %v1162, 0
        %v1198 = vunpack.c.l.b16 %v1130
        %v1199 = vunpack.c.l.b16 %v1131
        %v1200 = vunpack.c.l.b16 %v1132
        %v1201 = vunpack.c.l.b16 %v1133
        %v1202 = vunpack.c.l.b16 %v1134
        %v1203 = vunpack.c.l.b16 %v1135
        %v1204 = vunpack.c.l.b16 %v1136
        %v1205 = vunpack.c.l.b16 %v1137
        %v1206 = vunpack.c.l.b16 %v1138
        %v1207 = vunpack.c.l.b16 %v1139
        %v1208 = vunpack.c.l.b16 %v1140
        %v1209 = vunpack.c.l.b16 %v1141
        %v1210 = vunpack.c.l.b16 %v1142
        %v1211 = vunpack.c.l.b16 %v1143
        %v1212 = vunpack.c.l.b16 %v1144
        %v1213 = vunpack.c.l.b16 %v1145
        %v1214 = vunpack.c.l.b16 %v1146
        %v1215 = vunpack.c.l.b16 %v1147
        %v1216 = vunpack.c.l.b16 %v1148
        %v1217 = vunpack.c.l.b16 %v1149
        %v1218 = vunpack.c.l.b16 %v1150
        %v1219 = vunpack.c.l.b16 %v1151
        %v1220 = vunpack.c.l.b16 %v1152
        %v1221 = vunpack.c.l.b16 %v1153
        %v1222 = vunpack.c.l.b16 %v1154
        %v1223 = vunpack.c.l.b16 %v1155
        %v1224 = vunpack.c.l.b16 %v1156
        %v1225 = vunpack.c.l.b16 %v1157
        %v1226 = vunpack.c.l.b16 %v1158
        %v1227 = vunpack.c.l.b16 %v1159
        %v1228 = vunpack.c.l.b16 %v1160
        %v1229 = vunpack.c.l.b16 %v1161
        %v1230 = vpack.c.b16 %v1199, %v1198
        %v1231 = vpack.c.b16 %v1201, %v1200
        %v1232 = vpack.c.b16 %v1203, %v1202
        %v1233 = vpack.c.b16 %v1205, %v1204
        %v1234 = vpack.c.b16 %v1207, %v1206
        %v1235 = vpack.c.b16 %v1209, %v1208
        %v1236 = vpack.c.b16 %v1211, %v1210
        %v1237 = vpack.c.b16 %v1213, %v1212
        %v1238 = vpack.c.b16 %v1215, %v1214
        %v1239 = vpack.c.b16 %v1217, %v1216
        %v1240 = vpack.c.b16 %v1219, %v1218
        %v1241 = vpack.c.b16 %v1221, %v1220
        %v1242 = vpack.c.b16 %v1223, %v1222
        %v1243 = vpack.c.b16 %v1225, %v1224
        %v1244 = vpack.c.b16 %v1227, %v1226
        %v1245 = vpack.c.b16 %v1229, %v1228
        %1262 = vmatpush.bf16.msra.mxu0 %v1237
        %1263 = vmatpush.bf16.msra.mxu0 %v1236
        %1264 = vmatpush.bf16.msra.mxu0 %v1235
        %1265 = vmatpush.bf16.msra.mxu0 %v1234
        %1266 = vmatpush.bf16.msra.mxu0 %v1233
        %1267 = vmatpush.bf16.msra.mxu0 %v1232
        %1268 = vmatpush.bf16.msra.mxu0 %v1231
        %1269 = vmatpush.bf16.msra.mxu0 %v1230
        %1270 = vmatmul.bf16.gmra.mxu0 %v1114
        %v1271 = vpop.f32.mrf.mxu0
        %v1272 = vadd.f32 %v1164, %v1271
        %v1273 = vpop.f32.mrf.mxu0
        %v1274 = vadd.f32 %v1164, %v1273
        %1275 = vmatmul.bf16.gmra.mxu0 %v1116
        %v1276 = vpop.f32.mrf.mxu0
        %v1277 = vadd.f32 %v1164, %v1276
        %v1278 = vpop.f32.mrf.mxu0
        %v1279 = vadd.f32 %v1164, %v1278
        %1280 = vmatmul.bf16.gmra.mxu0 %v1118
        %v1281 = vpop.f32.mrf.mxu0
        %v1282 = vadd.f32 %v1164, %v1281
        %v1283 = vpop.f32.mrf.mxu0
        %v1284 = vadd.f32 %v1164, %v1283
        %1285 = vmatmul.bf16.gmra.mxu0 %v1120
        %v1286 = vpop.f32.mrf.mxu0
        %v1287 = vadd.f32 %v1164, %v1286
        %v1288 = vpop.f32.mrf.mxu0
        %v1289 = vadd.f32 %v1164, %v1288
        %1290 = vmatmul.bf16.gmra.mxu0 %v1122
        %v1291 = vpop.f32.mrf.mxu0
        %v1292 = vadd.f32 %v1164, %v1291
        %v1293 = vpop.f32.mrf.mxu0
        %v1294 = vadd.f32 %v1164, %v1293
        %1295 = vmatmul.bf16.gmra.mxu0 %v1124
        %v1296 = vpop.f32.mrf.mxu0
        %v1297 = vadd.f32 %v1164, %v1296
        %v1298 = vpop.f32.mrf.mxu0
        %v1299 = vadd.f32 %v1164, %v1298
        %1300 = vmatmul.bf16.gmra.mxu0 %v1126
        %v1301 = vpop.f32.mrf.mxu0
        %v1302 = vadd.f32 %v1164, %v1301
        %v1303 = vpop.f32.mrf.mxu0
        %v1304 = vadd.f32 %v1164, %v1303
        %1305 = vmatmul.bf16.gmra.mxu0 %v1128
        %v1306 = vpop.f32.mrf.mxu0
        %v1307 = vadd.f32 %v1164, %v1306
        %v1308 = vpop.f32.mrf.mxu0
        %v1309 = vadd.f32 %v1164, %v1308
        %1310 = vdwg.mxu0
        %1311 = vmatpush.bf16.msra.mxu0 %v1245
        %1312 = vmatpush.bf16.msra.mxu0 %v1244
        %1313 = vmatpush.bf16.msra.mxu0 %v1243
        %1314 = vmatpush.bf16.msra.mxu0 %v1242
        %1315 = vmatpush.bf16.msra.mxu0 %v1241
        %1316 = vmatpush.bf16.msra.mxu0 %v1240
        %1317 = vmatpush.bf16.msra.mxu0 %v1239
        %1318 = vmatpush.bf16.msra.mxu0 %v1238
        %1319 = vmatmul.bf16.gmra.mxu0 %v1115
        %v1320 = vpop.f32.mrf.mxu0
        %v1321 = vadd.f32 %v1272, %v1320
        %v1322 = vpop.f32.mrf.mxu0
        %v1323 = vadd.f32 %v1274, %v1322
        %1324 = vmatmul.bf16.gmra.mxu0 %v1117
        %v1325 = vpop.f32.mrf.mxu0
        %v1326 = vadd.f32 %v1277, %v1325
        %v1327 = vpop.f32.mrf.mxu0
        %v1328 = vadd.f32 %v1279, %v1327
        %1329 = vmatmul.bf16.gmra.mxu0 %v1119
        %v1330 = vpop.f32.mrf.mxu0
        %v1331 = vadd.f32 %v1282, %v1330
        %v1332 = vpop.f32.mrf.mxu0
        %v1333 = vadd.f32 %v1284, %v1332
        %1334 = vmatmul.bf16.gmra.mxu0 %v1121
        %v1335 = vpop.f32.mrf.mxu0
        %v1336 = vadd.f32 %v1287, %v1335
        %v1337 = vpop.f32.mrf.mxu0
        %v1338 = vadd.f32 %v1289, %v1337
        %1339 = vmatmul.bf16.gmra.mxu0 %v1123
        %v1340 = vpop.f32.mrf.mxu0
        %v1341 = vadd.f32 %v1292, %v1340
        %v1342 = vpop.f32.mrf.mxu0
        %v1343 = vadd.f32 %v1294, %v1342
        %1344 = vmatmul.bf16.gmra.mxu0 %v1125
        %v1345 = vpop.f32.mrf.mxu0
        %v1346 = vadd.f32 %v1297, %v1345
        %v1347 = vpop.f32.mrf.mxu0
        %v1348 = vadd.f32 %v1299, %v1347
        %1349 = vmatmul.bf16.gmra.mxu0 %v1127
        %v1350 = vpop.f32.mrf.mxu0
        %v1351 = vadd.f32 %v1302, %v1350
        %v1352 = vpop.f32.mrf.mxu0
        %v1353 = vadd.f32 %v1304, %v1352
        %1354 = vmatmul.bf16.gmra.mxu0 %v1129
        %v1355 = vpop.f32.mrf.mxu0
        %v1356 = vadd.f32 %v1307, %v1355
        %v1357 = vpop.f32.mrf.mxu0
        %v1358 = vadd.f32 %v1309, %v1357
        %1359 = vdwg.mxu0
        %v1360 = vld [vmem:[#allocation3] sm:$0xff]
        %v1361 = vld [vmem:[#allocation3 + $0x8] sm:$0xff]
        %v1362 = vld [vmem:[#allocation3 + $0x10] sm:$0xff]
        %v1363 = vld [vmem:[#allocation3 + $0x18] sm:$0xff]
        %v1364 = vld [vmem:[#allocation3 + $0x20] sm:$0xff]
        %v1365 = vld [vmem:[#allocation3 + $0x28] sm:$0xff]
        %v1366 = vld [vmem:[#allocation3 + $0x30] sm:$0xff]
        %v1367 = vld [vmem:[#allocation3 + $0x38] sm:$0xff]
        %v1368 = vld [vmem:[#allocation3 + $0x40] sm:$0xff]
        %v1369 = vld [vmem:[#allocation3 + $0x48] sm:$0xff]
        %v1370 = vld [vmem:[#allocation3 + $0x50] sm:$0xff]
        %v1371 = vld [vmem:[#allocation3 + $0x58] sm:$0xff]
        %v1372 = vld [vmem:[#allocation3 + $0x60] sm:$0xff]
        %v1373 = vld [vmem:[#allocation3 + $0x68] sm:$0xff]
        %v1374 = vld [vmem:[#allocation3 + $0x70] sm:$0xff]
        %v1375 = vld [vmem:[#allocation3 + $0x78] sm:$0xff]
        %vm1376 = vcmp.eq.f32.partialorder %v1360, 0.0
        %vm1377 = vcmp.eq.f32.partialorder %v1361, 0.0
        %vm1378 = vcmp.eq.f32.partialorder %v1362, 0.0
        %vm1379 = vcmp.eq.f32.partialorder %v1363, 0.0
        %vm1380 = vcmp.eq.f32.partialorder %v1364, 0.0
        %vm1381 = vcmp.eq.f32.partialorder %v1365, 0.0
        %vm1382 = vcmp.eq.f32.partialorder %v1366, 0.0
        %vm1383 = vcmp.eq.f32.partialorder %v1367, 0.0
        %vm1384 = vcmp.eq.f32.partialorder %v1368, 0.0
        %vm1385 = vcmp.eq.f32.partialorder %v1369, 0.0
        %vm1386 = vcmp.eq.f32.partialorder %v1370, 0.0
        %vm1387 = vcmp.eq.f32.partialorder %v1371, 0.0
        %vm1388 = vcmp.eq.f32.partialorder %v1372, 0.0
        %vm1389 = vcmp.eq.f32.partialorder %v1373, 0.0
        %vm1390 = vcmp.eq.f32.partialorder %v1374, 0.0
        %vm1391 = vcmp.eq.f32.partialorder %v1375, 0.0
        %v1392 = vsel %vm1376, -3.4e+38, %v1321
        %v1393 = vsel %vm1377, -3.4e+38, %v1323
        %v1394 = vsel %vm1378, -3.4e+38, %v1326
        %v1395 = vsel %vm1379, -3.4e+38, %v1328
        %v1396 = vsel %vm1380, -3.4e+38, %v1331
        %v1397 = vsel %vm1381, -3.4e+38, %v1333
        %v1398 = vsel %vm1382, -3.4e+38, %v1336
        %v1399 = vsel %vm1383, -3.4e+38, %v1338
        %v1400 = vsel %vm1384, -3.4e+38, %v1341
        %v1401 = vsel %vm1385, -3.4e+38, %v1343
        %v1402 = vsel %vm1386, -3.4e+38, %v1346
        %v1403 = vsel %vm1387, -3.4e+38, %v1348
        %v1404 = vsel %vm1388, -3.4e+38, %v1351
        %v1405 = vsel %vm1389, -3.4e+38, %v1353
        %v1406 = vsel %vm1390, -3.4e+38, %v1356
        %v1407 = vsel %vm1391, -3.4e+38, %v1358
        %1408 = vmax.xlane.f32.xlu0 %v1392
        %v1409 = vpop.xlane.xlu0 %1408
        %1410 = vmax.xlane.f32.xlu0 %v1393
        %v1411 = vpop.xlane.xlu0 %1410
        %1412 = vmax.xlane.f32.xlu0 %v1394
        %v1413 = vpop.xlane.xlu0 %1412
        %1414 = vmax.xlane.f32.xlu0 %v1395
        %v1415 = vpop.xlane.xlu0 %1414
        %1416 = vmax.xlane.f32.xlu0 %v1396
        %v1417 = vpop.xlane.xlu0 %1416
        %1418 = vmax.xlane.f32.xlu0 %v1397
        %v1419 = vpop.xlane.xlu0 %1418
        %1420 = vmax.xlane.f32.xlu0 %v1398
        %v1421 = vpop.xlane.xlu0 %1420
        %1422 = vmax.xlane.f32.xlu0 %v1399
        %v1423 = vpop.xlane.xlu0 %1422
        %1424 = vmax.xlane.f32.xlu0 %v1400
        %v1425 = vpop.xlane.xlu0 %1424
        %1426 = vmax.xlane.f32.xlu0 %v1401
        %v1427 = vpop.xlane.xlu0 %1426
        %1428 = vmax.xlane.f32.xlu0 %v1402
        %v1429 = vpop.xlane.xlu0 %1428
        %1430 = vmax.xlane.f32.xlu0 %v1403
        %v1431 = vpop.xlane.xlu0 %1430
        %1432 = vmax.xlane.f32.xlu0 %v1404
        %v1433 = vpop.xlane.xlu0 %1432
        %1434 = vmax.xlane.f32.xlu0 %v1405
        %v1435 = vpop.xlane.xlu0 %1434
        %1436 = vmax.xlane.f32.xlu0 %v1406
        %v1437 = vpop.xlane.xlu0 %1436
        %1438 = vmax.xlane.f32.xlu0 %v1407
        %v1439 = vpop.xlane.xlu0 %1438
        %v1440 = vlaneseq
        %v1441 = vand.u32 %v1440, 127
        %vm1442 = vcmp.eq.f32.partialorder %v1392, %v1409
        %vm1443 = vcmp.eq.f32.partialorder %v1393, %v1411
        %vm1444 = vcmp.eq.f32.partialorder %v1394, %v1413
        %vm1445 = vcmp.eq.f32.partialorder %v1395, %v1415
        %vm1446 = vcmp.eq.f32.partialorder %v1396, %v1417
        %vm1447 = vcmp.eq.f32.partialorder %v1397, %v1419
        %vm1448 = vcmp.eq.f32.partialorder %v1398, %v1421
        %vm1449 = vcmp.eq.f32.partialorder %v1399, %v1423
        %vm1450 = vcmp.eq.f32.partialorder %v1400, %v1425
        %vm1451 = vcmp.eq.f32.partialorder %v1401, %v1427
        %vm1452 = vcmp.eq.f32.partialorder %v1402, %v1429
        %vm1453 = vcmp.eq.f32.partialorder %v1403, %v1431
        %vm1454 = vcmp.eq.f32.partialorder %v1404, %v1433
        %vm1455 = vcmp.eq.f32.partialorder %v1405, %v1435
        %vm1456 = vcmp.eq.f32.partialorder %v1406, %v1437
        %vm1457 = vcmp.eq.f32.partialorder %v1407, %v1439
        %v1458 = vsel %vm1442, %v1441, 1073741824
        %v1459 = vsel %vm1443, %v1441, 1073741824
        %v1460 = vsel %vm1444, %v1441, 1073741824
        %v1461 = vsel %vm1445, %v1441, 1073741824
        %v1462 = vsel %vm1446, %v1441, 1073741824
        %v1463 = vsel %vm1447, %v1441, 1073741824
        %v1464 = vsel %vm1448, %v1441, 1073741824
        %v1465 = vsel %vm1449, %v1441, 1073741824
        %v1466 = vsel %vm1450, %v1441, 1073741824
        %v1467 = vsel %vm1451, %v1441, 1073741824
        %v1468 = vsel %vm1452, %v1441, 1073741824
        %v1469 = vsel %vm1453, %v1441, 1073741824
        %v1470 = vsel %vm1454, %v1441, 1073741824
        %v1471 = vsel %vm1455, %v1441, 1073741824
        %v1472 = vsel %vm1456, %v1441, 1073741824
        %v1473 = vsel %vm1457, %v1441, 1073741824
        %v1474 = vand.u32 %v1458, 65535
        %v1475 = vshra.s32 %v1458, 16
        %v1476 = vcvt.s32.f32 %v1474
        %v1477 = vcvt.s32.f32 %v1475
        %1478 = vmin.xlane.f32.xlu0 %v1477
        %v1479 = vpop.xlane.xlu0 %1478
        %vm1480 = vcmp.eq.f32.partialorder %v1477, %v1479
        %v1481 = vsel %vm1480, %v1476, inf
        %1482 = vmin.xlane.f32.xlu0 %v1481
        %v1483 = vpop.xlane.xlu0 %1482
        %v1484 = vcvt.f32.s32 %v1483
        %v1485 = vcvt.f32.s32 %v1479
        %v1486 = vshll.u32 %v1485, 16
        %v1487 = vadd.s32 %v1486, %v1484
        %v1488 = vand.u32 %v1459, 65535
        %v1489 = vshra.s32 %v1459, 16
        %v1490 = vcvt.s32.f32 %v1488
        %v1491 = vcvt.s32.f32 %v1489
        %1492 = vmin.xlane.f32.xlu0 %v1491
        %v1493 = vpop.xlane.xlu0 %1492
        %vm1494 = vcmp.eq.f32.partialorder %v1491, %v1493
        %v1495 = vsel %vm1494, %v1490, inf
        %1496 = vmin.xlane.f32.xlu0 %v1495
        %v1497 = vpop.xlane.xlu0 %1496
        %v1498 = vcvt.f32.s32 %v1497
        %v1499 = vcvt.f32.s32 %v1493
        %v1500 = vshll.u32 %v1499, 16
        %v1501 = vadd.s32 %v1500, %v1498
        %v1502 = vand.u32 %v1460, 65535
        %v1503 = vshra.s32 %v1460, 16
        %v1504 = vcvt.s32.f32 %v1502
        %v1505 = vcvt.s32.f32 %v1503
        %1506 = vmin.xlane.f32.xlu0 %v1505
        %v1507 = vpop.xlane.xlu0 %1506
        %vm1508 = vcmp.eq.f32.partialorder %v1505, %v1507
        %v1509 = vsel %vm1508, %v1504, inf
        %1510 = vmin.xlane.f32.xlu0 %v1509
        %v1511 = vpop.xlane.xlu0 %1510
        %v1512 = vcvt.f32.s32 %v1511
        %v1513 = vcvt.f32.s32 %v1507
        %v1514 = vshll.u32 %v1513, 16
        %v1515 = vadd.s32 %v1514, %v1512
        %v1516 = vand.u32 %v1461, 65535
        %v1517 = vshra.s32 %v1461, 16
        %v1518 = vcvt.s32.f32 %v1516
        %v1519 = vcvt.s32.f32 %v1517
        %1520 = vmin.xlane.f32.xlu0 %v1519
        %v1521 = vpop.xlane.xlu0 %1520
        %vm1522 = vcmp.eq.f32.partialorder %v1519, %v1521
        %v1523 = vsel %vm1522, %v1518, inf
        %1524 = vmin.xlane.f32.xlu0 %v1523
        %v1525 = vpop.xlane.xlu0 %1524
        %v1526 = vcvt.f32.s32 %v1525
        %v1527 = vcvt.f32.s32 %v1521
        %v1528 = vshll.u32 %v1527, 16
        %v1529 = vadd.s32 %v1528, %v1526
        %v1530 = vand.u32 %v1462, 65535
        %v1531 = vshra.s32 %v1462, 16
        %v1532 = vcvt.s32.f32 %v1530
        %v1533 = vcvt.s32.f32 %v1531
        %1534 = vmin.xlane.f32.xlu0 %v1533
        %v1535 = vpop.xlane.xlu0 %1534
        %vm1536 = vcmp.eq.f32.partialorder %v1533, %v1535
        %v1537 = vsel %vm1536, %v1532, inf
        %1538 = vmin.xlane.f32.xlu0 %v1537
        %v1539 = vpop.xlane.xlu0 %1538
        %v1540 = vcvt.f32.s32 %v1539
        %v1541 = vcvt.f32.s32 %v1535
        %v1542 = vshll.u32 %v1541, 16
        %v1543 = vadd.s32 %v1542, %v1540
        %v1544 = vand.u32 %v1463, 65535
        %v1545 = vshra.s32 %v1463, 16
        %v1546 = vcvt.s32.f32 %v1544
        %v1547 = vcvt.s32.f32 %v1545
        %1548 = vmin.xlane.f32.xlu0 %v1547
        %v1549 = vpop.xlane.xlu0 %1548
        %vm1550 = vcmp.eq.f32.partialorder %v1547, %v1549
        %v1551 = vsel %vm1550, %v1546, inf
        %1552 = vmin.xlane.f32.xlu0 %v1551
        %v1553 = vpop.xlane.xlu0 %1552
        %v1554 = vcvt.f32.s32 %v1553
        %v1555 = vcvt.f32.s32 %v1549
        %v1556 = vshll.u32 %v1555, 16
        %v1557 = vadd.s32 %v1556, %v1554
        %v1558 = vand.u32 %v1464, 65535
        %v1559 = vshra.s32 %v1464, 16
        %v1560 = vcvt.s32.f32 %v1558
        %v1561 = vcvt.s32.f32 %v1559
        %1562 = vmin.xlane.f32.xlu0 %v1561
        %v1563 = vpop.xlane.xlu0 %1562
        %vm1564 = vcmp.eq.f32.partialorder %v1561, %v1563
        %v1565 = vsel %vm1564, %v1560, inf
        %1566 = vmin.xlane.f32.xlu0 %v1565
        %v1567 = vpop.xlane.xlu0 %1566
        %v1568 = vcvt.f32.s32 %v1567
        %v1569 = vcvt.f32.s32 %v1563
        %v1570 = vshll.u32 %v1569, 16
        %v1571 = vadd.s32 %v1570, %v1568
        %v1572 = vand.u32 %v1465, 65535
        %v1573 = vshra.s32 %v1465, 16
        %v1574 = vcvt.s32.f32 %v1572
        %v1575 = vcvt.s32.f32 %v1573
        %1576 = vmin.xlane.f32.xlu0 %v1575
        %v1577 = vpop.xlane.xlu0 %1576
        %vm1578 = vcmp.eq.f32.partialorder %v1575, %v1577
        %v1579 = vsel %vm1578, %v1574, inf
        %1580 = vmin.xlane.f32.xlu0 %v1579
        %v1581 = vpop.xlane.xlu0 %1580
        %v1582 = vcvt.f32.s32 %v1581
        %v1583 = vcvt.f32.s32 %v1577
        %v1584 = vshll.u32 %v1583, 16
        %v1585 = vadd.s32 %v1584, %v1582
        %v1586 = vand.u32 %v1466, 65535
        %v1587 = vshra.s32 %v1466, 16
        %v1588 = vcvt.s32.f32 %v1586
        %v1589 = vcvt.s32.f32 %v1587
        %1590 = vmin.xlane.f32.xlu0 %v1589
        %v1591 = vpop.xlane.xlu0 %1590
        %vm1592 = vcmp.eq.f32.partialorder %v1589, %v1591
        %v1593 = vsel %vm1592, %v1588, inf
        %1594 = vmin.xlane.f32.xlu0 %v1593
        %v1595 = vpop.xlane.xlu0 %1594
        %v1596 = vcvt.f32.s32 %v1595
        %v1597 = vcvt.f32.s32 %v1591
        %v1598 = vshll.u32 %v1597, 16
        %v1599 = vadd.s32 %v1598, %v1596
        %v1600 = vand.u32 %v1467, 65535
        %v1601 = vshra.s32 %v1467, 16
        %v1602 = vcvt.s32.f32 %v1600
        %v1603 = vcvt.s32.f32 %v1601
        %1604 = vmin.xlane.f32.xlu0 %v1603
        %v1605 = vpop.xlane.xlu0 %1604
        %vm1606 = vcmp.eq.f32.partialorder %v1603, %v1605
        %v1607 = vsel %vm1606, %v1602, inf
        %1608 = vmin.xlane.f32.xlu0 %v1607
        %v1609 = vpop.xlane.xlu0 %1608
        %v1610 = vcvt.f32.s32 %v1609
        %v1611 = vcvt.f32.s32 %v1605
        %v1612 = vshll.u32 %v1611, 16
        %v1613 = vadd.s32 %v1612, %v1610
        %v1614 = vand.u32 %v1468, 65535
        %v1615 = vshra.s32 %v1468, 16
        %v1616 = vcvt.s32.f32 %v1614
        %v1617 = vcvt.s32.f32 %v1615
        %1618 = vmin.xlane.f32.xlu0 %v1617
        %v1619 = vpop.xlane.xlu0 %1618
        %vm1620 = vcmp.eq.f32.partialorder %v1617, %v1619
        %v1621 = vsel %vm1620, %v1616, inf
        %1622 = vmin.xlane.f32.xlu0 %v1621
        %v1623 = vpop.xlane.xlu0 %1622
        %v1624 = vcvt.f32.s32 %v1623
        %v1625 = vcvt.f32.s32 %v1619
        %v1626 = vshll.u32 %v1625, 16
        %v1627 = vadd.s32 %v1626, %v1624
        %v1628 = vand.u32 %v1469, 65535
        %v1629 = vshra.s32 %v1469, 16
        %v1630 = vcvt.s32.f32 %v1628
        %v1631 = vcvt.s32.f32 %v1629
        %1632 = vmin.xlane.f32.xlu0 %v1631
        %v1633 = vpop.xlane.xlu0 %1632
        %vm1634 = vcmp.eq.f32.partialorder %v1631, %v1633
        %v1635 = vsel %vm1634, %v1630, inf
        %1636 = vmin.xlane.f32.xlu0 %v1635
        %v1637 = vpop.xlane.xlu0 %1636
        %v1638 = vcvt.f32.s32 %v1637
        %v1639 = vcvt.f32.s32 %v1633
        %v1640 = vshll.u32 %v1639, 16
        %v1641 = vadd.s32 %v1640, %v1638
        %v1642 = vand.u32 %v1470, 65535
        %v1643 = vshra.s32 %v1470, 16
        %v1644 = vcvt.s32.f32 %v1642
        %v1645 = vcvt.s32.f32 %v1643
        %1646 = vmin.xlane.f32.xlu0 %v1645
        %v1647 = vpop.xlane.xlu0 %1646
        %vm1648 = vcmp.eq.f32.partialorder %v1645, %v1647
        %v1649 = vsel %vm1648, %v1644, inf
        %1650 = vmin.xlane.f32.xlu0 %v1649
        %v1651 = vpop.xlane.xlu0 %1650
        %v1652 = vcvt.f32.s32 %v1651
        %v1653 = vcvt.f32.s32 %v1647
        %v1654 = vshll.u32 %v1653, 16
        %v1655 = vadd.s32 %v1654, %v1652
        %v1656 = vand.u32 %v1471, 65535
        %v1657 = vshra.s32 %v1471, 16
        %v1658 = vcvt.s32.f32 %v1656
        %v1659 = vcvt.s32.f32 %v1657
        %1660 = vmin.xlane.f32.xlu0 %v1659
        %v1661 = vpop.xlane.xlu0 %1660
        %vm1662 = vcmp.eq.f32.partialorder %v1659, %v1661
        %v1663 = vsel %vm1662, %v1658, inf
        %1664 = vmin.xlane.f32.xlu0 %v1663
        %v1665 = vpop.xlane.xlu0 %1664
        %v1666 = vcvt.f32.s32 %v1665
        %v1667 = vcvt.f32.s32 %v1661
        %v1668 = vshll.u32 %v1667, 16
        %v1669 = vadd.s32 %v1668, %v1666
        %v1670 = vand.u32 %v1472, 65535
        %v1671 = vshra.s32 %v1472, 16
        %v1672 = vcvt.s32.f32 %v1670
        %v1673 = vcvt.s32.f32 %v1671
        %1674 = vmin.xlane.f32.xlu0 %v1673
        %v1675 = vpop.xlane.xlu0 %1674
        %vm1676 = vcmp.eq.f32.partialorder %v1673, %v1675
        %v1677 = vsel %vm1676, %v1672, inf
        %1678 = vmin.xlane.f32.xlu0 %v1677
        %v1679 = vpop.xlane.xlu0 %1678
        %v1680 = vcvt.f32.s32 %v1679
        %v1681 = vcvt.f32.s32 %v1675
        %v1682 = vshll.u32 %v1681, 16
        %v1683 = vadd.s32 %v1682, %v1680
        %v1684 = vand.u32 %v1473, 65535
        %v1685 = vshra.s32 %v1473, 16
        %v1686 = vcvt.s32.f32 %v1684
        %v1687 = vcvt.s32.f32 %v1685
        %1688 = vmin.xlane.f32.xlu0 %v1687
        %v1689 = vpop.xlane.xlu0 %1688
        %vm1690 = vcmp.eq.f32.partialorder %v1687, %v1689
        %v1691 = vsel %vm1690, %v1686, inf
        %1692 = vmin.xlane.f32.xlu0 %v1691
        %v1693 = vpop.xlane.xlu0 %1692
        %v1694 = vcvt.f32.s32 %v1693
        %v1695 = vcvt.f32.s32 %v1689
        %v1696 = vshll.u32 %v1695, 16
        %v1697 = vadd.s32 %v1696, %v1694
        %v1698 = vperm.slane %v1487, %v1441
        %v1699 = vadd.s32 %v1441, 4294967288
        %v1700 = vperm.slane %v1501, %v1699
        %vm1701 = vcmask 130112
        %v1702 = vsel %vm1701, %v1700, %v1698
        %v1703 = vadd.s32 %v1441, 4294967280
        %v1704 = vperm.slane %v1515, %v1703
        %vm1705 = vcmask 195712
        %v1706 = vsel %vm1705, %v1704, %v1702
        %v1707 = vadd.s32 %v1441, 4294967272
        %v1708 = vperm.slane %v1529, %v1707
        %vm1709 = vcmask 261312
        %v1710 = vsel %vm1709, %v1708, %v1706
        %v1711 = vadd.s32 %v1441, 4294967264
        %v1712 = vperm.slane %v1543, %v1711
        %vm1713 = vcmask 326912
        %v1714 = vsel %vm1713, %v1712, %v1710
        %v1715 = vadd.s32 %v1441, 4294967256
        %v1716 = vperm.slane %v1557, %v1715
        %vm1717 = vcmask 392512
        %v1718 = vsel %vm1717, %v1716, %v1714
        %v1719 = vadd.s32 %v1441, 4294967248
        %v1720 = vperm.slane %v1571, %v1719
        %vm1721 = vcmask 458112
        %v1722 = vsel %vm1721, %v1720, %v1718
        %v1723 = vadd.s32 %v1441, 4294967240
        %v1724 = vperm.slane %v1585, %v1723
        %vm1725 = vcmask 523712
        %v1726 = vsel %vm1725, %v1724, %v1722
        %v1727 = vadd.s32 %v1441, 4294967232
        %v1728 = vperm.slane %v1599, %v1727
        %vm1729 = vcmask 589312
        %v1730 = vsel %vm1729, %v1728, %v1726
        %v1731 = vadd.s32 %v1441, 4294967224
        %v1732 = vperm.slane %v1613, %v1731
        %vm1733 = vcmask 654912
        %v1734 = vsel %vm1733, %v1732, %v1730
        %v1735 = vadd.s32 %v1441, 4294967216
        %v1736 = vperm.slane %v1627, %v1735
        %vm1737 = vcmask 720512
        %v1738 = vsel %vm1737, %v1736, %v1734
        %v1739 = vadd.s32 %v1441, 4294967208
        %v1740 = vperm.slane %v1641, %v1739
        %vm1741 = vcmask 786112
        %v1742 = vsel %vm1741, %v1740, %v1738
        %v1743 = vadd.s32 %v1441, 4294967200
        %v1744 = vperm.slane %v1655, %v1743
        %vm1745 = vcmask 851712
        %v1746 = vsel %vm1745, %v1744, %v1742
        %v1747 = vadd.s32 %v1441, 4294967192
        %v1748 = vperm.slane %v1669, %v1747
        %vm1749 = vcmask 917312
        %v1750 = vsel %vm1749, %v1748, %v1746
        %v1751 = vadd.s32 %v1441, 4294967184
        %v1752 = vperm.slane %v1683, %v1751
        %vm1753 = vcmask 982912
        %v1754 = vsel %vm1753, %v1752, %v1750
        %v1755 = vadd.s32 %v1441, 4294967176
        %v1756 = vperm.slane %v1697, %v1755
        %vm1757 = vcmask 1048512
        %v1758 = vsel %vm1757, %v1756, %v1754
        %1759 = vst [vmem:[%s314] sm:$0x1] %v1758
        %s1760 = sand.u32 %s208, 1
        %s1761 = scalar_lea.sflag [#allocation5], %s1760
        %s1762 = sand.u32 %s208, 1
        %s1763 = scalar_lea.vmem [#allocation4], %s1762
        // Predicated region
        $region53: #{model_export_forward.1} parent=51 // pred_check
          %p1764 = pneg %p218
        $region54: #{model_export_forward.1} parent=51 // pred_check_branch
          %1766 = sbr.rel (%p1764) target = $region56
        $region55: #{model_export_forward.1} parent=51 // pred_region
          %1768 = vsyncadd %s1761, 0
          %s1769 = scalar_lea.hbm %s8, %s22
          %s1771 = sshll.u32 %s1763, 4
          %s1772 = int_to_ptr.vmem [resolvable:$true] %s1771
          %s1773 = sshll.u32 %s1769, 4
          %s1774 = int_to_ptr.hbm [resolvable:$true] %s1773
          %1776 = dma.vmem_to_hbm [thread:$0]  %s1772, 16, %s1774, %s1761
        $region56: #{model_export_forward.1} parent=51 // pred_fallthru
          _
      $region52: #{model_export_forward.1} parent=5 // pred_fallthru
        _
      %p1777 = scmp.le.s32.totalorder 2, %s17
      // Predicated region
      $region57: #{model_export_forward.1} parent=5 // pred_check
        %p1778 = pneg %p1777
      $region58: #{model_export_forward.1} parent=5 // pred_check_branch
        %1780 = sbr.rel (%p1778) target = $region60
      $region59: #{model_export_forward.1} parent=5 // pred_region
        %s1781 = ssub.s32 %s17, 2
        // Predicated region
        $region61: #{model_export_forward.1} parent=59 // pred_check
          %p1782 = pneg %p224
        $region62: #{model_export_forward.1} parent=59 // pred_check_branch
          %1784 = sbr.rel (%p1782) target = $region64
        $region63: #{model_export_forward.1} parent=59 // pred_region
          %s1785 = sand.u32 %s209, 1
          %s1786 = scalar_lea.sflag [#allocation5], %s1785
          %s1787 = sand.u32 %s209, 1
          %s1788 = scalar_lea.vmem [#allocation4], %s1787
          %1790 = dma.done %s1786, 16
        $region64: #{model_export_forward.1} parent=59 // pred_fallthru
          _
      $region60: #{model_export_forward.1} parent=5 // pred_fallthru
        _
    $region6: #{model_export_forward.1} parent=1 // loop_footer
      %s21 = sadd.s32 1, %s17
    $region7: #{model_export_forward.1} parent=1 // loop_footer_branch
      %16 = sbr.rel target = $region3
    $region8: #{model_export_forward.1} parent=1 // loop_exit
      _
    %1791 = vsyncpa [#allocation5], 1
    %s1792 = scalar_lea.sflag [#allocation5], 1
    %1793 = vsyncpa %s1792, 1

</llo_original>
